<compile_context>
chip_gen: v5e
topology: v5e:2x2
jax: 0.10.0
libtpu: 0.0.40
codegen_flags: <defaults>
</compile_context>

<pallas_src>
import functools

import numpy as np

import jax
import jax.numpy as jnp
from jax import lax
from jax.experimental import pallas as pl
from jax.experimental.pallas import tpu as pltpu


# ---------------------------------------------------------------------------
# Helpers
# ---------------------------------------------------------------------------
def _pick_tile(dim, desired, align):
    """Largest tile <= desired that evenly divides `dim` respecting `align`
    (falls back to the full dim, which always satisfies the (8,128) rule)."""
    if dim <= desired:
        return dim
    if dim % desired == 0:
        return desired
    t = (desired // align) * align
    while t >= align:
        if dim % t == 0:
            return t
        t -= align
    return dim


@functools.lru_cache(maxsize=None)
def _vmem_limit_bytes():
    """Generation-aware VMEM budget: ~48 MiB on v7x (64 MiB physical/TC),
    ~96 MiB on v5e/v6e (128 MiB physical)."""
    try:
        cap = int(pltpu.get_tpu_info().vmem_capacity_bytes)
    except Exception:
        cap = 64 * 1024 * 1024  # conservative fallback (v7x physical per TC)
    return max(32 * 1024 * 1024, min((cap * 3) // 4, 112 * 1024 * 1024))


@functools.lru_cache(maxsize=None)
def _bf16_exp_supported():
    """bf16 EUP exists on v6e / v7x; never use the bf16 exp path on v5e/older."""
    try:
        kind = jax.devices()[0].device_kind.lower()
    except Exception:
        return False
    return ("v6" in kind) or ("v7" in kind) or ("7x" in kind)


# ---------------------------------------------------------------------------
# Tiled linear projection: y = x @ W (+ b), fp32 accumulation
# ---------------------------------------------------------------------------
def _linear_kernel(x_ref, w_ref, o_ref, acc_ref):
    @pl.when(pl.program_id(2) == 0)
    def _():
        acc_ref[...] = jnp.zeros(acc_ref.shape, acc_ref.dtype)

    acc_ref[...] += jnp.dot(x_ref[...].astype(w_ref.dtype), w_ref[...],
                            preferred_element_type=jnp.float32)

    @pl.when(pl.program_id(2) == pl.num_programs(2) - 1)
    def _():
        o_ref[...] = acc_ref[...].astype(o_ref.dtype)


def _linear_bias_kernel(x_ref, w_ref, b_ref, o_ref, acc_ref):
    @pl.when(pl.program_id(2) == 0)
    def _():
        acc_ref[...] = jnp.zeros(acc_ref.shape, acc_ref.dtype)

    acc_ref[...] += jnp.dot(x_ref[...].astype(w_ref.dtype), w_ref[...],
                            preferred_element_type=jnp.float32)

    @pl.when(pl.program_id(2) == pl.num_programs(2) - 1)
    def _():
        o_ref[...] = (acc_ref[...] + b_ref[...].astype(jnp.float32)
                      ).astype(o_ref.dtype)


def pallas_linear(x2d, w, b=None, *, out_dtype=None):
    """x2d: (M, K), w: (K, N), b: optional (N,) fp32 -> (M, N) in out_dtype.
    The x block is cast to the weight dtype inside the kernel (no separate
    HBM cast pass)."""
    M, K = x2d.shape
    K2, N = w.shape
    assert K == K2
    out_dtype = x2d.dtype if out_dtype is None else out_dtype
    out_bytes = np.dtype(out_dtype).itemsize

    # Perf review: lane-dense tn -> full N when it fits so the activation
    # block is DMA'd once (no N/tn re-reads of x); big tm / tk.
    tn = N if N <= 2048 else _pick_tile(N, 1024, 128)
    budget = _vmem_limit_bytes() // 2   # headroom for double buffering

    def need(tm_, tk_):
        return (2 * (tm_ * tk_ * x2d.dtype.itemsize          # x block (dbl buf)
                     + tk_ * tn * w.dtype.itemsize            # w block
                     + tm_ * tn * out_bytes)                   # out block
                + tm_ * tn * 4)                                # fp32 accumulator

    tm, tkc = M, K
    for tm_d, tk_d in ((512, 1024), (512, 512), (256, 512), (256, 256),
                       (128, 256), (128, 128), (64, 128), (32, 128)):
        tm = _pick_tile(M, tm_d, 8)
        tkc = _pick_tile(K, tk_d, 128)
        if need(tm, tkc) <= budget:
            break

    grid = (M // tm, N // tn, K // tkc)

    in_specs = [
        pl.BlockSpec((tm, tkc), lambda i, j, k: (i, k)),
        pl.BlockSpec((tkc, tn), lambda i, j, k: (k, j)),
    ]
    args = [x2d, w]
    kernel = _linear_kernel
    if b is not None:
        in_specs.append(pl.BlockSpec((1, tn), lambda i, j, k: (0, j)))
        args.append(b.astype(jnp.float32).reshape(1, N))
        kernel = _linear_bias_kernel

    cost = pl.CostEstimate(
        flops=int(2 * M * N * K),
        transcendentals=0,
        bytes_accessed=int(x2d.size * x2d.dtype.itemsize
                           + w.size * w.dtype.itemsize + M * N * out_bytes))

    return pl.pallas_call(
        kernel,
        out_shape=jax.ShapeDtypeStruct((M, N), out_dtype),
        grid=grid,
        in_specs=in_specs,
        out_specs=pl.BlockSpec((tm, tn), lambda i, j, k: (i, j)),
        scratch_shapes=[pltpu.VMEM((tm, tn), jnp.float32)],
        compiler_params=pltpu.CompilerParams(
            dimension_semantics=("parallel", "parallel", "arbitrary"),
            vmem_limit_bytes=_vmem_limit_bytes()),
        cost_estimate=cost,
    )(*args)


# ---------------------------------------------------------------------------
# Flash-style multi-head attention on head-packed (lane-dense) buffers.
#   q:  (B, Nq, H*d)      (softmax scale already folded into W_q)
#   kv: (B, Nk, 2*H*d)    columns = [K (H*d) | V (H*d)]
#   out:(B, Nq, H*d)      lane-dense, consumed directly by the out projection
# grid = (B, Nq//tq, Nk//tk); online softmax with fp32 stats / accumulator.
# ---------------------------------------------------------------------------
_KV_BUFFER_COUNT = 2   # set to 3 to triple-buffer the K/V stream (perf experiment)


def _flash_attn_kernel(q_ref, kv_ref, o_ref, m_sc, l_sc, acc_sc, *,
                       heads, dim_head, exp_dtype):
    kv_step = pl.program_id(2)
    inner = heads * dim_head

    @pl.when(kv_step == 0)
    def _():
        m_sc[...] = jnp.full(m_sc.shape, -jnp.inf, dtype=m_sc.dtype)
        l_sc[...] = jnp.zeros(l_sc.shape, l_sc.dtype)
        acc_sc[...] = jnp.zeros(acc_sc.shape, acc_sc.dtype)

    q = q_ref[...]     # (tq, H*d)
    kv = kv_ref[...]   # (tk, 2*H*d)

    for h in range(heads):                       # static, small (4-8) unroll
        lo, hi = h * dim_head, (h + 1) * dim_head
        q_h = q[:, lo:hi]                        # (tq, d)
        k_h = kv[:, lo:hi]                       # (tk, d)
        v_h = kv[:, inner + lo:inner + hi]       # (tk, d)

        # s = q_h @ k_h^T (contract last dims; no materialized transpose).
        s = lax.dot_general(q_h, k_h, (((1,), (1,)), ((), ())),
                            preferred_element_type=jnp.float32)   # (tq, tk)

        m_prev = m_sc[h]                                           # (tq, 1)
        m_new = jnp.maximum(m_prev, s.max(axis=-1, keepdims=True))
        alpha = jnp.exp(m_prev - m_new)                            # fp32 stats
        # exp in bf16 on v6e/v7x (halves EUP pressure + no MXU cast); fp32 on v5e.
        p = jnp.exp((s - m_new).astype(exp_dtype))                 # (tq, tk)
        l_sc[h] = alpha * l_sc[h] + p.sum(axis=-1, keepdims=True).astype(jnp.float32)

        pv = lax.dot_general(p.astype(v_h.dtype), v_h,
                             (((1,), (0,)), ((), ())),
                             preferred_element_type=jnp.float32)   # (tq, d)
        acc_sc[h] = alpha * acc_sc[h] + pv
        m_sc[h] = m_new

    @pl.when(kv_step == pl.num_programs(2) - 1)
    def _():
        for h in range(heads):
            l_h = l_sc[h]
            inv = pl.reciprocal(l_h, approx=True)
            inv = inv * (2.0 - l_h * inv)          # one Newton step -> ~exact 1/l
            o_ref[:, h * dim_head:(h + 1) * dim_head] = (
                acc_sc[h] * inv).astype(o_ref.dtype)


def pallas_flash_attention(q, kv, *, heads, dim_head, exp_dtype=None,
                           out_dtype=None):
    B, Nq, inner = q.shape
    _, Nk, two_inner = kv.shape
    assert inner == heads * dim_head and two_inner == 2 * inner
    out_dtype = q.dtype if out_dtype is None else out_dtype
    if exp_dtype is None:
        exp_dtype = (jnp.bfloat16
                     if (q.dtype == jnp.bfloat16 and _bf16_exp_supported())
                     else jnp.float32)

    # Perf review: large q tiles (K/V HBM re-reads scale with Nq/tq) and 256-row
    # K/V tiles; per-step fp32 temporaries (tq, tk) per head stay well in VMEM.
    tq = _pick_tile(Nq, 512, 8)
    tk = _pick_tile(Nk, 256, 8)
    # v7x megacore: keep the parallel grid extent >= 2 so neither TC idles.
    if B * (Nq // tq) < 2:
        tq_alt = _pick_tile(Nq, max(8, (Nq // 2 // 8) * 8), 8)
        if tq_alt >= 8 and Nq % tq_alt == 0 and B * (Nq // tq_alt) >= 2:
            tq = tq_alt
    grid = (B, Nq // tq, Nk // tk)

    kernel = functools.partial(_flash_attn_kernel, heads=heads,
                               dim_head=dim_head, exp_dtype=exp_dtype)

    kv_kwargs = {}
    if _KV_BUFFER_COUNT > 2:
        kv_kwargs["pipeline_mode"] = pl.Buffered(_KV_BUFFER_COUNT)

    cost = pl.CostEstimate(
        flops=int(4 * B * heads * Nq * Nk * dim_head),
        transcendentals=int(B * heads * Nq * Nk),
        bytes_accessed=int(q.size * q.dtype.itemsize
                           + kv.size * kv.dtype.itemsize * max(1, Nq // tq)
                           + B * Nq * inner * np.dtype(out_dtype).itemsize))

    return pl.pallas_call(
        kernel,
        out_shape=jax.ShapeDtypeStruct((B, Nq, inner), out_dtype),
        grid=grid,
        in_specs=[
            pl.BlockSpec((None, tq, inner), lambda b, qi, ki: (b, qi, 0)),
            pl.BlockSpec((None, tk, two_inner), lambda b, qi, ki: (b, ki, 0),
                         **kv_kwargs),
        ],
        out_specs=pl.BlockSpec((None, tq, inner), lambda b, qi, ki: (b, qi, 0)),
        scratch_shapes=[
            pltpu.VMEM((heads, tq, 1), jnp.float32),         # running max
            pltpu.VMEM((heads, tq, 1), jnp.float32),         # running sum
            pltpu.VMEM((heads, tq, dim_head), jnp.float32),  # fp32 O accumulator
        ],
        compiler_params=pltpu.CompilerParams(
            dimension_semantics=("parallel", "parallel", "arbitrary"),
            vmem_limit_bytes=_vmem_limit_bytes()),
        cost_estimate=cost,
    )(q, kv)


# ---------------------------------------------------------------------------
# Parameters + module-level forward (mirrors Attention.forward, mask=None)
# ---------------------------------------------------------------------------
def init_attention_params(key, query_dim, context_dim=None, heads=8, dim_head=64):
    """Raw fp32 parameters in (in_features, out_features) layout."""
    context_dim = query_dim if context_dim is None else context_dim
    inner_dim = dim_head * heads
    k1, k2, k3, k4 = jax.random.split(key, 4)
    return {
        "w_q": jax.random.normal(k1, (query_dim, inner_dim), jnp.float32) * 0.05,
        "w_kv": jax.random.normal(k2, (context_dim, inner_dim * 2), jnp.float32) * 0.05,
        "w_out": jax.random.normal(k3, (inner_dim, query_dim), jnp.float32) * 0.05,
        "b_out": jax.random.normal(k4, (query_dim,), jnp.float32) * 0.05,
    }


def prepare_attention_params(params, heads, dim_head, compute_dtype=jnp.bfloat16):
    """One-time weight prep hoisted out of the forward (perf review):
    softmax scale folded into W_q in fp32 (numerically safest, zero kernel
    cost) and weights cast to the MXU compute dtype."""
    scale = dim_head ** (-0.5)
    return {
        "w_q": (params["w_q"] * scale).astype(compute_dtype),
        "w_kv": params["w_kv"].astype(compute_dtype),
        "w_out": params["w_out"].astype(compute_dtype),
        "b_out": params["b_out"].astype(jnp.float32),
    }


def attention_forward(params, x, context=None, mask=None, *, heads=8, dim_head=64):
    """Matches Attention.forward with mask=None. `params` must come from
    prepare_attention_params."""
    # TODO(synk): mask path (masked_fill before softmax) not implemented; plan
    # is scalar-prefetched per-block mask metadata + pl.when tile skipping.
    if mask is not None:
        raise NotImplementedError("mask path not implemented")

    B, Nq, Dq = x.shape
    ctx = x if context is None else context
    _, Nk, Dc = ctx.shape
    inner = heads * dim_head
    cd = params["w_q"].dtype

    # Projections (inputs are cast to the weight dtype inside the kernel).
    q2d = pallas_linear(x.reshape(B * Nq, Dq), params["w_q"], out_dtype=cd)
    kv2d = pallas_linear(ctx.reshape(B * Nk, Dc), params["w_kv"], out_dtype=cd)

    # (B*N, C) -> (B, N, C) are free views; heads stay packed on the lane dim,
    # so there are no HBM-level head split/merge transposes anywhere.
    o = pallas_flash_attention(q2d.reshape(B, Nq, inner),
                               kv2d.reshape(B, Nk, 2 * inner),
                               heads=heads, dim_head=dim_head)

    # Output projection with bias (fp32 accumulation, fp32 result).
    y = pallas_linear(o.reshape(B * Nq, inner), params["w_out"], params["b_out"],
                      out_dtype=jnp.float32)
    return y.reshape(B, Nq, Dq)


# ---------------------------------------------------------------------------
# Pure-JAX fp32 reference (uses raw params, mirrors the PyTorch module)
# ---------------------------------------------------------------------------
def attention_reference(params, x, context=None, *, heads=8, dim_head=64):
    ctx = x if context is None else context
    B, Nq, _ = x.shape
    _, Nk, _ = ctx.shape
    inner = heads * dim_head
    scale = dim_head ** (-0.5)
    q = x @ params["w_q"]
    kv = ctx @ params["w_kv"]
    k, v = kv[..., :inner], kv[..., inner:]

    def sh(t, n):
        return t.reshape(B, n, heads, dim_head).transpose(0, 2, 1, 3)

    qh, kh, vh = sh(q, Nq), sh(k, Nk), sh(v, Nk)
    sim = jnp.einsum("bhid,bhjd->bhij", qh, kh) * scale
    attn = jax.nn.softmax(sim, axis=-1)
    o = jnp.einsum("bhij,bhjd->bhid", attn, vh)
    o = o.transpose(0, 2, 1, 3).reshape(B, Nq, inner)
    return o @ params["w_out"] + params["b_out"]


if __name__ == "__main__":
    # Small shapes consistent with the module's forward.
    B, N = 2, 8            # batch, sequence length
    QUERY_DIM = 32         # model dim
    HEADS, DIM_HEAD = 4, 16
    N_CTX = 16             # cross-attention context length

    key = jax.random.PRNGKey(0)
    kx, kc, kp = jax.random.split(key, 3)
    x = jax.random.normal(kx, (B, N, QUERY_DIM), jnp.float32)
    ctx = jax.random.normal(kc, (B, N_CTX, QUERY_DIM), jnp.float32)
    raw = init_attention_params(kp, QUERY_DIM, heads=HEADS, dim_head=DIM_HEAD)

    y_ref_self = attention_reference(raw, x, heads=HEADS, dim_head=DIM_HEAD)
    y_ref_cross = attention_reference(raw, x, ctx, heads=HEADS, dim_head=DIM_HEAD)

    fwd = jax.jit(functools.partial(attention_forward,
                                    heads=HEADS, dim_head=DIM_HEAD))

    # fp32 compute path: tight correctness check (self- and cross-attention).
    p32 = prepare_attention_params(raw, HEADS, DIM_HEAD, jnp.float32)
    y32 = jax.block_until_ready(fwd(p32, x))
    assert y32.shape == (B, N, QUERY_DIM)
    assert jnp.allclose(y32, y_ref_self, atol=2e-2, rtol=2e-2), "fp32 self mismatch"

    y32x = jax.block_until_ready(fwd(p32, x, ctx))
    assert y32x.shape == (B, N, QUERY_DIM)
    assert jnp.allclose(y32x, y_ref_cross, atol=2e-2, rtol=2e-2), "fp32 cross mismatch"

    # bf16 MXU operands (production config): looser tolerance.
    p16 = prepare_attention_params(raw, HEADS, DIM_HEAD, jnp.bfloat16)
    y16 = jax.block_until_ready(fwd(p16, x)).astype(jnp.float32)
    assert y16.shape == (B, N, QUERY_DIM)
    assert jnp.allclose(y16, y_ref_self, atol=6e-2, rtol=6e-2), "bf16 self mismatch"

    print("KERNEL_OK")
</pallas_src>

<mosaic_0001>
module attributes {stable_mosaic.version = 11 : i64} {
  func.func @_linear_kernel(%arg0: i32, %arg1: i32, %arg2: i32, %arg3: memref<16x32xf32, #tpu.memory_space<vmem>>, %arg4: memref<32x128xf32, #tpu.memory_space<vmem>>, %arg5: memref<16x128xf32, #tpu.memory_space<vmem>>, %arg6: memref<16x128xf32, #tpu.memory_space<vmem>>) attributes {dimension_semantics = [#tpu.dimension_semantics<parallel>, #tpu.dimension_semantics<parallel>, #tpu.dimension_semantics<arbitrary>], iteration_bounds = array<i64: 1, 1, 1>, scalar_prefetch = 0 : i64, scratch_operands = 1 : i64, tpu.core_type = #tpu.core_type<tc>, window_params = [{transform_indices = @transform_0, window_bounds = array<i64: 16, 32>}, {transform_indices = @transform_1, window_bounds = array<i64: 32, 128>}, {transform_indices = @transform_2, window_bounds = array<i64: 16, 128>}]} {
    %c0_i32 = arith.constant 0 : i32
    %0 = arith.cmpi eq, %arg2, %c0_i32 : i32
    %1 = arith.extui %0 : i1 to i32
    %c0_i32_0 = arith.constant 0 : i32
    %2 = arith.cmpi ne, %1, %c0_i32_0 : i32
    scf.if %2 {
      %cst_10 = arith.constant 0.000000e+00 : f32
      %12 = vector.broadcast %cst_10 : f32 to vector<16x128xf32>
      %c0_11 = arith.constant 0 : index
      %c0_12 = arith.constant 0 : index
      %13 = vector.load %arg6[%c0_11, %c0_12] : memref<16x128xf32, #tpu.memory_space<vmem>>, vector<16x128xf32>
      tpu.vector_store %arg6[%c0_11, %c0_12], %12 {strides = array<i32>} : memref<16x128xf32, #tpu.memory_space<vmem>>, vector<16x128xf32>,
    } else {
    }
    %c0 = arith.constant 0 : index
    %c0_1 = arith.constant 0 : index
    %3 = vector.load %arg6[%c0, %c0_1] : memref<16x128xf32, #tpu.memory_space<vmem>>, vector<16x128xf32>
    %c0_2 = arith.constant 0 : index
    %c0_3 = arith.constant 0 : index
    %4 = vector.load %arg3[%c0_2, %c0_3] : memref<16x32xf32, #tpu.memory_space<vmem>>, vector<16x32xf32>
    %c0_4 = arith.constant 0 : index
    %c0_5 = arith.constant 0 : index
    %5 = vector.load %arg4[%c0_4, %c0_5] : memref<32x128xf32, #tpu.memory_space<vmem>>, vector<32x128xf32>
    %cst = arith.constant dense<0.000000e+00> : vector<16x128xf32>
    %6 = tpu.matmul %4, %5, %cst {dimension_numbers = #tpu.dot_dimension_numbers<[1], [0], [0], [1], [0, 0, 1, 1], [], []>} : vector<16x32xf32>, vector<32x128xf32>, vector<16x128xf32> -> vector<16x128xf32>
    %7 = arith.addf %3, %6 : vector<16x128xf32>
    %c0_6 = arith.constant 0 : index
    %c0_7 = arith.constant 0 : index
    %8 = vector.load %arg6[%c0_6, %c0_7] : memref<16x128xf32, #tpu.memory_space<vmem>>, vector<16x128xf32>
    tpu.vector_store %arg6[%c0_6, %c0_7], %7 {strides = array<i32>} : memref<16x128xf32, #tpu.memory_space<vmem>>, vector<16x128xf32>,
    %c0_i32_8 = arith.constant 0 : i32
    %9 = arith.cmpi eq, %arg2, %c0_i32_8 : i32
    %10 = arith.extui %9 : i1 to i32
    %c0_i32_9 = arith.constant 0 : i32
    %11 = arith.cmpi ne, %10, %c0_i32_9 : i32
    scf.if %11 {
      %c0_10 = arith.constant 0 : index
      %c0_11 = arith.constant 0 : index
      %12 = vector.load %arg6[%c0_10, %c0_11] : memref<16x128xf32, #tpu.memory_space<vmem>>, vector<16x128xf32>
      %c0_12 = arith.constant 0 : index
      %c0_13 = arith.constant 0 : index
      %13 = vector.load %arg5[%c0_12, %c0_13] : memref<16x128xf32, #tpu.memory_space<vmem>>, vector<16x128xf32>
      tpu.vector_store %arg5[%c0_12, %c0_13], %12 {strides = array<i32>} : memref<16x128xf32, #tpu.memory_space<vmem>>, vector<16x128xf32>,
    } else {
    }
    return
  }
  func.func @transform_0(%arg0: i32, %arg1: i32, %arg2: i32) -> (i32, i32) {
    %c0_i32 = arith.constant 0 : i32
    return %arg0, %arg2 : i32, i32
  }
  func.func @transform_1(%arg0: i32, %arg1: i32, %arg2: i32) -> (i32, i32) {
    %c0_i32 = arith.constant 0 : i32
    return %arg2, %arg1 : i32, i32
  }
  func.func @transform_2(%arg0: i32, %arg1: i32, %arg2: i32) -> (i32, i32) {
    %c0_i32 = arith.constant 0 : i32
    return %arg0, %arg1 : i32, i32
  }
}

module attributes {stable_mosaic.version = 11 : i64} {
  func.func @_linear_kernel(%arg0: i32, %arg1: i32, %arg2: i32, %arg3: memref<16x32xf32, #tpu.memory_space<vmem>>, %arg4: memref<32x64xf32, #tpu.memory_space<vmem>>, %arg5: memref<16x64xf32, #tpu.memory_space<vmem>>, %arg6: memref<16x64xf32, #tpu.memory_space<vmem>>) attributes {dimension_semantics = [#tpu.dimension_semantics<parallel>, #tpu.dimension_semantics<parallel>, #tpu.dimension_semantics<arbitrary>], iteration_bounds = array<i64: 1, 1, 1>, scalar_prefetch = 0 : i64, scratch_operands = 1 : i64, tpu.core_type = #tpu.core_type<tc>, window_params = [{transform_indices = @transform_0, window_bounds = array<i64: 16, 32>}, {transform_indices = @transform_1, window_bounds = array<i64: 32, 64>}, {transform_indices = @transform_2, window_bounds = array<i64: 16, 64>}]} {
    %c0_i32 = arith.constant 0 : i32
    %0 = arith.cmpi eq, %arg2, %c0_i32 : i32
    %1 = arith.extui %0 : i1 to i32
    %c0_i32_0 = arith.constant 0 : i32
    %2 = arith.cmpi ne, %1, %c0_i32_0 : i32
    scf.if %2 {
      %cst_10 = arith.constant 0.000000e+00 : f32
      %12 = vector.broadcast %cst_10 : f32 to vector<16x64xf32>
      %c0_11 = arith.constant 0 : index
      %c0_12 = arith.constant 0 : index
      %13 = vector.load %arg6[%c0_11, %c0_12] : memref<16x64xf32, #tpu.memory_space<vmem>>, vector<16x64xf32>
      tpu.vector_store %arg6[%c0_11, %c0_12], %12 {strides = array<i32>} : memref<16x64xf32, #tpu.memory_space<vmem>>, vector<16x64xf32>,
    } else {
    }
    %c0 = arith.constant 0 : index
    %c0_1 = arith.constant 0 : index
    %3 = vector.load %arg6[%c0, %c0_1] : memref<16x64xf32, #tpu.memory_space<vmem>>, vector<16x64xf32>
    %c0_2 = arith.constant 0 : index
    %c0_3 = arith.constant 0 : index
    %4 = vector.load %arg3[%c0_2, %c0_3] : memref<16x32xf32, #tpu.memory_space<vmem>>, vector<16x32xf32>
    %c0_4 = arith.constant 0 : index
    %c0_5 = arith.constant 0 : index
    %5 = vector.load %arg4[%c0_4, %c0_5] : memref<32x64xf32, #tpu.memory_space<vmem>>, vector<32x64xf32>
    %cst = arith.constant dense<0.000000e+00> : vector<16x64xf32>
    %6 = tpu.matmul %4, %5, %cst {dimension_numbers = #tpu.dot_dimension_numbers<[1], [0], [0], [1], [0, 0, 1, 1], [], []>} : vector<16x32xf32>, vector<32x64xf32>, vector<16x64xf32> -> vector<16x64xf32>
    %7 = arith.addf %3, %6 : vector<16x64xf32>
    %c0_6 = arith.constant 0 : index
    %c0_7 = arith.constant 0 : index
    %8 = vector.load %arg6[%c0_6, %c0_7] : memref<16x64xf32, #tpu.memory_space<vmem>>, vector<16x64xf32>
    tpu.vector_store %arg6[%c0_6, %c0_7], %7 {strides = array<i32>} : memref<16x64xf32, #tpu.memory_space<vmem>>, vector<16x64xf32>,
    %c0_i32_8 = arith.constant 0 : i32
    %9 = arith.cmpi eq, %arg2, %c0_i32_8 : i32
    %10 = arith.extui %9 : i1 to i32
    %c0_i32_9 = arith.constant 0 : i32
    %11 = arith.cmpi ne, %10, %c0_i32_9 : i32
    scf.if %11 {
      %c0_10 = arith.constant 0 : index
      %c0_11 = arith.constant 0 : index
      %12 = vector.load %arg6[%c0_10, %c0_11] : memref<16x64xf32, #tpu.memory_space<vmem>>, vector<16x64xf32>
      %c0_12 = arith.constant 0 : index
      %c0_13 = arith.constant 0 : index
      %13 = vector.load %arg5[%c0_12, %c0_13] : memref<16x64xf32, #tpu.memory_space<vmem>>, vector<16x64xf32>
      tpu.vector_store %arg5[%c0_12, %c0_13], %12 {strides = array<i32>} : memref<16x64xf32, #tpu.memory_space<vmem>>, vector<16x64xf32>,
    } else {
    }
    return
  }
  func.func @transform_0(%arg0: i32, %arg1: i32, %arg2: i32) -> (i32, i32) {
    %c0_i32 = arith.constant 0 : i32
    return %arg0, %arg2 : i32, i32
  }
  func.func @transform_1(%arg0: i32, %arg1: i32, %arg2: i32) -> (i32, i32) {
    %c0_i32 = arith.constant 0 : i32
    return %arg2, %arg1 : i32, i32
  }
  func.func @transform_2(%arg0: i32, %arg1: i32, %arg2: i32) -> (i32, i32) {
    %c0_i32 = arith.constant 0 : i32
    return %arg0, %arg1 : i32, i32
  }
}

module attributes {stable_mosaic.version = 11 : i64} {
  func.func @_flash_attn_kernel(%arg0: i32, %arg1: i32, %arg2: i32, %arg3: memref<1x8x64xf32, #tpu.memory_space<vmem>>, %arg4: memref<1x8x128xf32, #tpu.memory_space<vmem>>, %arg5: memref<1x8x64xf32, #tpu.memory_space<vmem>>, %arg6: memref<4x8x1xf32, #tpu.memory_space<vmem>>, %arg7: memref<4x8x1xf32, #tpu.memory_space<vmem>>, %arg8: memref<4x8x16xf32, #tpu.memory_space<vmem>>) attributes {dimension_semantics = [#tpu.dimension_semantics<parallel>, #tpu.dimension_semantics<parallel>, #tpu.dimension_semantics<arbitrary>], iteration_bounds = array<i64: 2, 1, 1>, scalar_prefetch = 0 : i64, scratch_operands = 3 : i64, tpu.core_type = #tpu.core_type<tc>, window_params = [{transform_indices = @transform_0, window_bounds = array<i64: 1, 8, 64>}, {transform_indices = @transform_1, window_bounds = array<i64: 1, 8, 128>}, {transform_indices = @transform_2, window_bounds = array<i64: 1, 8, 64>}]} {
    %c0_i32 = arith.constant 0 : i32
    %0 = arith.cmpi eq, %arg2, %c0_i32 : i32
    %1 = arith.extui %0 : i1 to i32
    %c0_i32_0 = arith.constant 0 : i32
    %2 = arith.cmpi ne, %1, %c0_i32_0 : i32
    scf.if %2 {
      %cst_92 = arith.constant 0xFF800000 : f32
      %150 = vector.broadcast %cst_92 : f32 to vector<4x8x1xf32>
      %c0_93 = arith.constant 0 : index
      %c0_94 = arith.constant 0 : index
      %c0_95 = arith.constant 0 : index
      %151 = vector.load %arg6[%c0_93, %c0_94, %c0_95] : memref<4x8x1xf32, #tpu.memory_space<vmem>>, vector<4x8x1xf32>
      tpu.vector_store %arg6[%c0_93, %c0_94, %c0_95], %150 {strides = array<i32>} : memref<4x8x1xf32, #tpu.memory_space<vmem>>, vector<4x8x1xf32>,
      %cst_96 = arith.constant 0.000000e+00 : f32
      %152 = vector.broadcast %cst_96 : f32 to vector<4x8x1xf32>
      %c0_97 = arith.constant 0 : index
      %c0_98 = arith.constant 0 : index
      %c0_99 = arith.constant 0 : index
      %153 = vector.load %arg7[%c0_97, %c0_98, %c0_99] : memref<4x8x1xf32, #tpu.memory_space<vmem>>, vector<4x8x1xf32>
      tpu.vector_store %arg7[%c0_97, %c0_98, %c0_99], %152 {strides = array<i32>} : memref<4x8x1xf32, #tpu.memory_space<vmem>>, vector<4x8x1xf32>,
      %cst_100 = arith.constant 0.000000e+00 : f32
      %154 = vector.broadcast %cst_100 : f32 to vector<4x8x16xf32>
      %c0_101 = arith.constant 0 : index
      %c0_102 = arith.constant 0 : index
      %c0_103 = arith.constant 0 : index
      %155 = vector.load %arg8[%c0_101, %c0_102, %c0_103] : memref<4x8x16xf32, #tpu.memory_space<vmem>>, vector<4x8x16xf32>
      tpu.vector_store %arg8[%c0_101, %c0_102, %c0_103], %154 {strides = array<i32>} : memref<4x8x16xf32, #tpu.memory_space<vmem>>, vector<4x8x16xf32>,
    } else {
    }
    %c0 = arith.constant 0 : index
    %c0_1 = arith.constant 0 : index
    %c0_2 = arith.constant 0 : index
    %3 = vector.load %arg3[%c0, %c0_1, %c0_2] : memref<1x8x64xf32, #tpu.memory_space<vmem>>, vector<1x8x64xf32>
    %4 = vector.shape_cast %3 : vector<1x8x64xf32> to vector<8x64xf32>
    %c0_3 = arith.constant 0 : index
    %c0_4 = arith.constant 0 : index
    %c0_5 = arith.constant 0 : index
    %5 = vector.load %arg4[%c0_3, %c0_4, %c0_5] : memref<1x8x128xf32, #tpu.memory_space<vmem>>, vector<1x8x128xf32>
    %6 = vector.shape_cast %5 : vector<1x8x128xf32> to vector<8x128xf32>
    %7 = vector.extract_strided_slice %4 {offsets = [0, 0], sizes = [8, 16], strides = [1, 1]} : vector<8x64xf32> to vector<8x16xf32>
    %8 = vector.extract_strided_slice %6 {offsets = [0, 0], sizes = [8, 16], strides = [1, 1]} : vector<8x128xf32> to vector<8x16xf32>
    %9 = vector.extract_strided_slice %6 {offsets = [0, 64], sizes = [8, 16], strides = [1, 1]} : vector<8x128xf32> to vector<8x16xf32>
    %cst = arith.constant dense<0.000000e+00> : vector<8x8xf32>
    %10 = tpu.matmul %7, %8, %cst {dimension_numbers = #tpu.dot_dimension_numbers<[1], [1], [0], [0], [0, 0, 1, 0], [], []>} : vector<8x16xf32>, vector<8x16xf32>, vector<8x8xf32> -> vector<8x8xf32>
    %c0_6 = arith.constant 0 : index
    %c0_7 = arith.constant 0 : index
    %c0_8 = arith.constant 0 : index
    %11 = vector.load %arg6[%c0_6, %c0_7, %c0_8] : memref<4x8x1xf32, #tpu.memory_space<vmem>>, vector<1x8x1xf32>
    %12 = vector.shape_cast %11 : vector<1x8x1xf32> to vector<8x1xf32>
    %cst_9 = arith.constant dense<0xFF800000> : vector<8xf32>
    %13 = vector.multi_reduction <maximumf>, %10, %cst_9 [1] : vector<8x8xf32> to vector<8xf32>
    %14 = vector.shape_cast %13 : vector<8xf32> to vector<8x1xf32>
    %15 = arith.maximumf %12, %14 : vector<8x1xf32>
    %16 = arith.subf %12, %15 : vector<8x1xf32>
    %17 = math.exp %16 : vector<8x1xf32>
    %18 = vector.broadcast %15 : vector<8x1xf32> to vector<8x8xf32>
    %19 = arith.subf %10, %18 : vector<8x8xf32>
    %20 = math.exp %19 : vector<8x8xf32>
    %c0_10 = arith.constant 0 : index
    %c0_11 = arith.constant 0 : index
    %c0_12 = arith.constant 0 : index
    %21 = vector.load %arg7[%c0_10, %c0_11, %c0_12] : memref<4x8x1xf32, #tpu.memory_space<vmem>>, vector<1x8x1xf32>
    %22 = vector.shape_cast %21 : vector<1x8x1xf32> to vector<8x1xf32>
    %23 = arith.mulf %17, %22 : vector<8x1xf32>
    %cst_13 = arith.constant dense<0.000000e+00> : vector<8xf32>
    %24 = vector.multi_reduction <add>, %20, %cst_13 [1] : vector<8x8xf32> to vector<8xf32>
    %25 = vector.shape_cast %24 : vector<8xf32> to vector<8x1xf32>
    %26 = arith.addf %23, %25 : vector<8x1xf32>
    %c0_14 = arith.constant 0 : index
    %c0_15 = arith.constant 0 : index
    %c0_16 = arith.constant 0 : index
    %27 = vector.load %arg7[%c0_14, %c0_15, %c0_16] : memref<4x8x1xf32, #tpu.memory_space<vmem>>, vector<1x8x1xf32>
    %28 = vector.shape_cast %27 : vector<1x8x1xf32> to vector<8x1xf32>
    %29 = vector.shape_cast %26 : vector<8x1xf32> to vector<1x8x1xf32>
    tpu.vector_store %arg7[%c0_14, %c0_15, %c0_16], %29 {strides = array<i32>} : memref<4x8x1xf32, #tpu.memory_space<vmem>>, vector<1x8x1xf32>,
    %cst_17 = arith.constant dense<0.000000e+00> : vector<8x16xf32>
    %30 = tpu.matmul %20, %9, %cst_17 {dimension_numbers = #tpu.dot_dimension_numbers<[1], [0], [0], [1], [0, 0, 1, 1], [], []>} : vector<8x8xf32>, vector<8x16xf32>, vector<8x16xf32> -> vector<8x16xf32>
    %c0_18 = arith.constant 0 : index
    %c0_19 = arith.constant 0 : index
    %c0_20 = arith.constant 0 : index
    %31 = vector.load %arg8[%c0_18, %c0_19, %c0_20] : memref<4x8x16xf32, #tpu.memory_space<vmem>>, vector<1x8x16xf32>
    %32 = vector.shape_cast %31 : vector<1x8x16xf32> to vector<8x16xf32>
    %33 = vector.broadcast %17 : vector<8x1xf32> to vector<8x16xf32>
    %34 = arith.mulf %33, %32 : vector<8x16xf32>
    %35 = arith.addf %34, %30 : vector<8x16xf32>
    %c0_21 = arith.constant 0 : index
    %c0_22 = arith.constant 0 : index
    %c0_23 = arith.constant 0 : index
    %36 = vector.load %arg8[%c0_21, %c0_22, %c0_23] : memref<4x8x16xf32, #tpu.memory_space<vmem>>, vector<1x8x16xf32>
    %37 = vector.shape_cast %36 : vector<1x8x16xf32> to vector<8x16xf32>
    %38 = vector.shape_cast %35 : vector<8x16xf32> to vector<1x8x16xf32>
    tpu.vector_store %arg8[%c0_21, %c0_22, %c0_23], %38 {strides = array<i32>} : memref<4x8x16xf32, #tpu.memory_space<vmem>>, vector<1x8x16xf32>,
    %c0_24 = arith.constant 0 : index
    %c0_25 = arith.constant 0 : index
    %c0_26 = arith.constant 0 : index
    %39 = vector.load %arg6[%c0_24, %c0_25, %c0_26] : memref<4x8x1xf32, #tpu.memory_space<vmem>>, vector<1x8x1xf32>
    %40 = vector.shape_cast %39 : vector<1x8x1xf32> to vector<8x1xf32>
    %41 = vector.shape_cast %15 : vector<8x1xf32> to vector<1x8x1xf32>
    tpu.vector_store %arg6[%c0_24, %c0_25, %c0_26], %41 {strides = array<i32>} : memref<4x8x1xf32, #tpu.memory_space<vmem>>, vector<1x8x1xf32>,
    %42 = vector.extract_strided_slice %4 {offsets = [0, 16], sizes = [8, 16], strides = [1, 1]} : vector<8x64xf32> to vector<8x16xf32>
    %43 = vector.extract_strided_slice %6 {offsets = [0, 16], sizes = [8, 16], strides = [1, 1]} : vector<8x128xf32> to vector<8x16xf32>
    %44 = vector.extract_strided_slice %6 {offsets = [0, 80], sizes = [8, 16], strides = [1, 1]} : vector<8x128xf32> to vector<8x16xf32>
    %cst_27 = arith.constant dense<0.000000e+00> : vector<8x8xf32>
    %45 = tpu.matmul %42, %43, %cst_27 {dimension_numbers = #tpu.dot_dimension_numbers<[1], [1], [0], [0], [0, 0, 1, 0], [], []>} : vector<8x16xf32>, vector<8x16xf32>, vector<8x8xf32> -> vector<8x8xf32>
    %c1 = arith.constant 1 : index
    %c0_28 = arith.constant 0 : index
    %c0_29 = arith.constant 0 : index
    %46 = vector.load %arg6[%c1, %c0_28, %c0_29] : memref<4x8x1xf32, #tpu.memory_space<vmem>>, vector<1x8x1xf32>
    %47 = vector.shape_cast %46 : vector<1x8x1xf32> to vector<8x1xf32>
    %cst_30 = arith.constant dense<0xFF800000> : vector<8xf32>
    %48 = vector.multi_reduction <maximumf>, %45, %cst_30 [1] : vector<8x8xf32> to vector<8xf32>
    %49 = vector.shape_cast %48 : vector<8xf32> to vector<8x1xf32>
    %50 = arith.maximumf %47, %49 : vector<8x1xf32>
    %51 = arith.subf %47, %50 : vector<8x1xf32>
    %52 = math.exp %51 : vector<8x1xf32>
    %53 = vector.broadcast %50 : vector<8x1xf32> to vector<8x8xf32>
    %54 = arith.subf %45, %53 : vector<8x8xf32>
    %55 = math.exp %54 : vector<8x8xf32>
    %c1_31 = arith.constant 1 : index
    %c0_32 = arith.constant 0 : index
    %c0_33 = arith.constant 0 : index
    %56 = vector.load %arg7[%c1_31, %c0_32, %c0_33] : memref<4x8x1xf32, #tpu.memory_space<vmem>>, vector<1x8x1xf32>
    %57 = vector.shape_cast %56 : vector<1x8x1xf32> to vector<8x1xf32>
    %58 = arith.mulf %52, %57 : vector<8x1xf32>
    %cst_34 = arith.constant dense<0.000000e+00> : vector<8xf32>
    %59 = vector.multi_reduction <add>, %55, %cst_34 [1] : vector<8x8xf32> to vector<8xf32>
    %60 = vector.shape_cast %59 : vector<8xf32> to vector<8x1xf32>
    %61 = arith.addf %58, %60 : vector<8x1xf32>
    %c1_35 = arith.constant 1 : index
    %c0_36 = arith.constant 0 : index
    %c0_37 = arith.constant 0 : index
    %62 = vector.load %arg7[%c1_35, %c0_36, %c0_37] : memref<4x8x1xf32, #tpu.memory_space<vmem>>, vector<1x8x1xf32>
    %63 = vector.shape_cast %62 : vector<1x8x1xf32> to vector<8x1xf32>
    %64 = vector.shape_cast %61 : vector<8x1xf32> to vector<1x8x1xf32>
    tpu.vector_store %arg7[%c1_35, %c0_36, %c0_37], %64 {strides = array<i32>} : memref<4x8x1xf32, #tpu.memory_space<vmem>>, vector<1x8x1xf32>,
    %cst_38 = arith.constant dense<0.000000e+00> : vector<8x16xf32>
    %65 = tpu.matmul %55, %44, %cst_38 {dimension_numbers = #tpu.dot_dimension_numbers<[1], [0], [0], [1], [0, 0, 1, 1], [], []>} : vector<8x8xf32>, vector<8x16xf32>, vector<8x16xf32> -> vector<8x16xf32>
    %c1_39 = arith.constant 1 : index
    %c0_40 = arith.constant 0 : index
    %c0_41 = arith.constant 0 : index
    %66 = vector.load %arg8[%c1_39, %c0_40, %c0_41] : memref<4x8x16xf32, #tpu.memory_space<vmem>>, vector<1x8x16xf32>
    %67 = vector.shape_cast %66 : vector<1x8x16xf32> to vector<8x16xf32>
    %68 = vector.broadcast %52 : vector<8x1xf32> to vector<8x16xf32>
    %69 = arith.mulf %68, %67 : vector<8x16xf32>
    %70 = arith.addf %69, %65 : vector<8x16xf32>
    %c1_42 = arith.constant 1 : index
    %c0_43 = arith.constant 0 : index
    %c0_44 = arith.constant 0 : index
    %71 = vector.load %arg8[%c1_42, %c0_43, %c0_44] : memref<4x8x16xf32, #tpu.memory_space<vmem>>, vector<1x8x16xf32>
    %72 = vector.shape_cast %71 : vector<1x8x16xf32> to vector<8x16xf32>
    %73 = vector.shape_cast %70 : vector<8x16xf32> to vector<1x8x16xf32>
    tpu.vector_store %arg8[%c1_42, %c0_43, %c0_44], %73 {strides = array<i32>} : memref<4x8x16xf32, #tpu.memory_space<vmem>>, vector<1x8x16xf32>,
    %c1_45 = arith.constant 1 : index
    %c0_46 = arith.constant 0 : index
    %c0_47 = arith.constant 0 : index
    %74 = vector.load %arg6[%c1_45, %c0_46, %c0_47] : memref<4x8x1xf32, #tpu.memory_space<vmem>>, vector<1x8x1xf32>
    %75 = vector.shape_cast %74 : vector<1x8x1xf32> to vector<8x1xf32>
    %76 = vector.shape_cast %50 : vector<8x1xf32> to vector<1x8x1xf32>
    tpu.vector_store %arg6[%c1_45, %c0_46, %c0_47], %76 {strides = array<i32>} : memref<4x8x1xf32, #tpu.memory_space<vmem>>, vector<1x8x1xf32>,
    %77 = vector.extract_strided_slice %4 {offsets = [0, 32], sizes = [8, 16], strides = [1, 1]} : vector<8x64xf32> to vector<8x16xf32>
    %78 = vector.extract_strided_slice %6 {offsets = [0, 32], sizes = [8, 16], strides = [1, 1]} : vector<8x128xf32> to vector<8x16xf32>
    %79 = vector.extract_strided_slice %6 {offsets = [0, 96], sizes = [8, 16], strides = [1, 1]} : vector<8x128xf32> to vector<8x16xf32>
    %cst_48 = arith.constant dense<0.000000e+00> : vector<8x8xf32>
    %80 = tpu.matmul %77, %78, %cst_48 {dimension_numbers = #tpu.dot_dimension_numbers<[1], [1], [0], [0], [0, 0, 1, 0], [], []>} : vector<8x16xf32>, vector<8x16xf32>, vector<8x8xf32> -> vector<8x8xf32>
    %c2 = arith.constant 2 : index
    %c0_49 = arith.constant 0 : index
    %c0_50 = arith.constant 0 : index
    %81 = vector.load %arg6[%c2, %c0_49, %c0_50] : memref<4x8x1xf32, #tpu.memory_space<vmem>>, vector<1x8x1xf32>
    %82 = vector.shape_cast %81 : vector<1x8x1xf32> to vector<8x1xf32>
    %cst_51 = arith.constant dense<0xFF800000> : vector<8xf32>
    %83 = vector.multi_reduction <maximumf>, %80, %cst_51 [1] : vector<8x8xf32> to vector<8xf32>
    %84 = vector.shape_cast %83 : vector<8xf32> to vector<8x1xf32>
    %85 = arith.maximumf %82, %84 : vector<8x1xf32>
    %86 = arith.subf %82, %85 : vector<8x1xf32>
    %87 = math.exp %86 : vector<8x1xf32>
    %88 = vector.broadcast %85 : vector<8x1xf32> to vector<8x8xf32>
    %89 = arith.subf %80, %88 : vector<8x8xf32>
    %90 = math.exp %89 : vector<8x8xf32>
    %c2_52 = arith.constant 2 : index
    %c0_53 = arith.constant 0 : index
    %c0_54 = arith.constant 0 : index
    %91 = vector.load %arg7[%c2_52, %c0_53, %c0_54] : memref<4x8x1xf32, #tpu.memory_space<vmem>>, vector<1x8x1xf32>
    %92 = vector.shape_cast %91 : vector<1x8x1xf32> to vector<8x1xf32>
    %93 = arith.mulf %87, %92 : vector<8x1xf32>
    %cst_55 = arith.constant dense<0.000000e+00> : vector<8xf32>
    %94 = vector.multi_reduction <add>, %90, %cst_55 [1] : vector<8x8xf32> to vector<8xf32>
    %95 = vector.shape_cast %94 : vector<8xf32> to vector<8x1xf32>
    %96 = arith.addf %93, %95 : vector<8x1xf32>
    %c2_56 = arith.constant 2 : index
    %c0_57 = arith.constant 0 : index
    %c0_58 = arith.constant 0 : index
    %97 = vector.load %arg7[%c2_56, %c0_57, %c0_58] : memref<4x8x1xf32, #tpu.memory_space<vmem>>, vector<1x8x1xf32>
    %98 = vector.shape_cast %97 : vector<1x8x1xf32> to vector<8x1xf32>
    %99 = vector.shape_cast %96 : vector<8x1xf32> to vector<1x8x1xf32>
    tpu.vector_store %arg7[%c2_56, %c0_57, %c0_58], %99 {strides = array<i32>} : memref<4x8x1xf32, #tpu.memory_space<vmem>>, vector<1x8x1xf32>,
    %cst_59 = arith.constant dense<0.000000e+00> : vector<8x16xf32>
    %100 = tpu.matmul %90, %79, %cst_59 {dimension_numbers = #tpu.dot_dimension_numbers<[1], [0], [0], [1], [0, 0, 1, 1], [], []>} : vector<8x8xf32>, vector<8x16xf32>, vector<8x16xf32> -> vector<8x16xf32>
    %c2_60 = arith.constant 2 : index
    %c0_61 = arith.constant 0 : index
    %c0_62 = arith.constant 0 : index
    %101 = vector.load %arg8[%c2_60, %c0_61, %c0_62] : memref<4x8x16xf32, #tpu.memory_space<vmem>>, vector<1x8x16xf32>
    %102 = vector.shape_cast %101 : vector<1x8x16xf32> to vector<8x16xf32>
    %103 = vector.broadcast %87 : vector<8x1xf32> to vector<8x16xf32>
    %104 = arith.mulf %103, %102 : vector<8x16xf32>
    %105 = arith.addf %104, %100 : vector<8x16xf32>
    %c2_63 = arith.constant 2 : index
    %c0_64 = arith.constant 0 : index
    %c0_65 = arith.constant 0 : index
    %106 = vector.load %arg8[%c2_63, %c0_64, %c0_65] : memref<4x8x16xf32, #tpu.memory_space<vmem>>, vector<1x8x16xf32>
    %107 = vector.shape_cast %106 : vector<1x8x16xf32> to vector<8x16xf32>
    %108 = vector.shape_cast %105 : vector<8x16xf32> to vector<1x8x16xf32>
    tpu.vector_store %arg8[%c2_63, %c0_64, %c0_65], %108 {strides = array<i32>} : memref<4x8x16xf32, #tpu.memory_space<vmem>>, vector<1x8x16xf32>,
    %c2_66 = arith.constant 2 : index
    %c0_67 = arith.constant 0 : index
    %c0_68 = arith.constant 0 : index
    %109 = vector.load %arg6[%c2_66, %c0_67, %c0_68] : memref<4x8x1xf32, #tpu.memory_space<vmem>>, vector<1x8x1xf32>
    %110 = vector.shape_cast %109 : vector<1x8x1xf32> to vector<8x1xf32>
    %111 = vector.shape_cast %85 : vector<8x1xf32> to vector<1x8x1xf32>
    tpu.vector_store %arg6[%c2_66, %c0_67, %c0_68], %111 {strides = array<i32>} : memref<4x8x1xf32, #tpu.memory_space<vmem>>, vector<1x8x1xf32>,
    %112 = vector.extract_strided_slice %4 {offsets = [0, 48], sizes = [8, 16], strides = [1, 1]} : vector<8x64xf32> to vector<8x16xf32>
    %113 = vector.extract_strided_slice %6 {offsets = [0, 48], sizes = [8, 16], strides = [1, 1]} : vector<8x128xf32> to vector<8x16xf32>
    %114 = vector.extract_strided_slice %6 {offsets = [0, 112], sizes = [8, 16], strides = [1, 1]} : vector<8x128xf32> to vector<8x16xf32>
    %cst_69 = arith.constant dense<0.000000e+00> : vector<8x8xf32>
    %115 = tpu.matmul %112, %113, %cst_69 {dimension_numbers = #tpu.dot_dimension_numbers<[1], [1], [0], [0], [0, 0, 1, 0], [], []>} : vector<8x16xf32>, vector<8x16xf32>, vector<8x8xf32> -> vector<8x8xf32>
    %c3 = arith.constant 3 : index
    %c0_70 = arith.constant 0 : index
    %c0_71 = arith.constant 0 : index
    %116 = vector.load %arg6[%c3, %c0_70, %c0_71] : memref<4x8x1xf32, #tpu.memory_space<vmem>>, vector<1x8x1xf32>
    %117 = vector.shape_cast %116 : vector<1x8x1xf32> to vector<8x1xf32>
    %cst_72 = arith.constant dense<0xFF800000> : vector<8xf32>
    %118 = vector.multi_reduction <maximumf>, %115, %cst_72 [1] : vector<8x8xf32> to vector<8xf32>
    %119 = vector.shape_cast %118 : vector<8xf32> to vector<8x1xf32>
    %120 = arith.maximumf %117, %119 : vector<8x1xf32>
    %121 = arith.subf %117, %120 : vector<8x1xf32>
    %122 = math.exp %121 : vector<8x1xf32>
    %123 = vector.broadcast %120 : vector<8x1xf32> to vector<8x8xf32>
    %124 = arith.subf %115, %123 : vector<8x8xf32>
    %125 = math.exp %124 : vector<8x8xf32>
    %c3_73 = arith.constant 3 : index
    %c0_74 = arith.constant 0 : index
    %c0_75 = arith.constant 0 : index
    %126 = vector.load %arg7[%c3_73, %c0_74, %c0_75] : memref<4x8x1xf32, #tpu.memory_space<vmem>>, vector<1x8x1xf32>
    %127 = vector.shape_cast %126 : vector<1x8x1xf32> to vector<8x1xf32>
    %128 = arith.mulf %122, %127 : vector<8x1xf32>
    %cst_76 = arith.constant dense<0.000000e+00> : vector<8xf32>
    %129 = vector.multi_reduction <add>, %125, %cst_76 [1] : vector<8x8xf32> to vector<8xf32>
    %130 = vector.shape_cast %129 : vector<8xf32> to vector<8x1xf32>
    %131 = arith.addf %128, %130 : vector<8x1xf32>
    %c3_77 = arith.constant 3 : index
    %c0_78 = arith.constant 0 : index
    %c0_79 = arith.constant 0 : index
    %132 = vector.load %arg7[%c3_77, %c0_78, %c0_79] : memref<4x8x1xf32, #tpu.memory_space<vmem>>, vector<1x8x1xf32>
    %133 = vector.shape_cast %132 : vector<1x8x1xf32> to vector<8x1xf32>
    %134 = vector.shape_cast %131 : vector<8x1xf32> to vector<1x8x1xf32>
    tpu.vector_store %arg7[%c3_77, %c0_78, %c0_79], %134 {strides = array<i32>} : memref<4x8x1xf32, #tpu.memory_space<vmem>>, vector<1x8x1xf32>,
    %cst_80 = arith.constant dense<0.000000e+00> : vector<8x16xf32>
    %135 = tpu.matmul %125, %114, %cst_80 {dimension_numbers = #tpu.dot_dimension_numbers<[1], [0], [0], [1], [0, 0, 1, 1], [], []>} : vector<8x8xf32>, vector<8x16xf32>, vector<8x16xf32> -> vector<8x16xf32>
    %c3_81 = arith.constant 3 : index
    %c0_82 = arith.constant 0 : index
    %c0_83 = arith.constant 0 : index
    %136 = vector.load %arg8[%c3_81, %c0_82, %c0_83] : memref<4x8x16xf32, #tpu.memory_space<vmem>>, vector<1x8x16xf32>
    %137 = vector.shape_cast %136 : vector<1x8x16xf32> to vector<8x16xf32>
    %138 = vector.broadcast %122 : vector<8x1xf32> to vector<8x16xf32>
    %139 = arith.mulf %138, %137 : vector<8x16xf32>
    %140 = arith.addf %139, %135 : vector<8x16xf32>
    %c3_84 = arith.constant 3 : index
    %c0_85 = arith.constant 0 : index
    %c0_86 = arith.constant 0 : index
    %141 = vector.load %arg8[%c3_84, %c0_85, %c0_86] : memref<4x8x16xf32, #tpu.memory_space<vmem>>, vector<1x8x16xf32>
    %142 = vector.shape_cast %141 : vector<1x8x16xf32> to vector<8x16xf32>
    %143 = vector.shape_cast %140 : vector<8x16xf32> to vector<1x8x16xf32>
    tpu.vector_store %arg8[%c3_84, %c0_85, %c0_86], %143 {strides = array<i32>} : memref<4x8x16xf32, #tpu.memory_space<vmem>>, vector<1x8x16xf32>,
    %c3_87 = arith.constant 3 : index
    %c0_88 = arith.constant 0 : index
    %c0_89 = arith.constant 0 : index
    %144 = vector.load %arg6[%c3_87, %c0_88, %c0_89] : memref<4x8x1xf32, #tpu.memory_space<vmem>>, vector<1x8x1xf32>
    %145 = vector.shape_cast %144 : vector<1x8x1xf32> to vector<8x1xf32>
    %146 = vector.shape_cast %120 : vector<8x1xf32> to vector<1x8x1xf32>
    tpu.vector_store %arg6[%c3_87, %c0_88, %c0_89], %146 {strides = array<i32>} : memref<4x8x1xf32, #tpu.memory_space<vmem>>, vector<1x8x1xf32>,
    %c0_i32_90 = arith.constant 0 : i32
    %147 = arith.cmpi eq, %arg2, %c0_i32_90 : i32
    %148 = arith.extui %147 : i1 to i32
    %c0_i32_91 = arith.constant 0 : i32
    %149 = arith.cmpi ne, %148, %c0_i32_91 : i32
    scf.if %149 {
      %c0_92 = arith.constant 0 : index
      %c0_93 = arith.constant 0 : index
      %c0_94 = arith.constant 0 : index
      %150 = vector.load %arg7[%c0_92, %c0_93, %c0_94] : memref<4x8x1xf32, #tpu.memory_space<vmem>>, vector<1x8x1xf32>
      %151 = vector.shape_cast %150 : vector<1x8x1xf32> to vector<8x1xf32>
      %152 = tpu.reciprocal %151 {approx = true} : vector<8x1xf32> -> vector<8x1xf32>
      %153 = arith.mulf %151, %152 : vector<8x1xf32>
      %cst_95 = arith.constant 2.000000e+00 : f32
      %154 = vector.broadcast %cst_95 : f32 to vector<8x1xf32>
      %155 = arith.subf %154, %153 : vector<8x1xf32>
      %156 = arith.mulf %152, %155 : vector<8x1xf32>
      %c0_96 = arith.constant 0 : index
      %c0_97 = arith.constant 0 : index
      %c0_98 = arith.constant 0 : index
      %157 = vector.load %arg8[%c0_96, %c0_97, %c0_98] : memref<4x8x16xf32, #tpu.memory_space<vmem>>, vector<1x8x16xf32>
      %158 = vector.shape_cast %157 : vector<1x8x16xf32> to vector<8x16xf32>
      %159 = vector.broadcast %156 : vector<8x1xf32> to vector<8x16xf32>
      %160 = arith.mulf %158, %159 : vector<8x16xf32>
      %c0_99 = arith.constant 0 : index
      %c0_100 = arith.constant 0 : index
      %c0_101 = arith.constant 0 : index
      %161 = vector.load %arg5[%c0_99, %c0_100, %c0_101] : memref<1x8x64xf32, #tpu.memory_space<vmem>>, vector<1x8x16xf32>
      %162 = vector.shape_cast %161 : vector<1x8x16xf32> to vector<8x16xf32>
      %163 = vector.shape_cast %160 : vector<8x16xf32> to vector<1x8x16xf32>
      tpu.vector_store %arg5[%c0_99, %c0_100, %c0_101], %163 {strides = array<i32>} : memref<1x8x64xf32, #tpu.memory_space<vmem>>, vector<1x8x16xf32>,
      %c1_102 = arith.constant 1 : index
      %c0_103 = arith.constant 0 : index
      %c0_104 = arith.constant 0 : index
      %164 = vector.load %arg7[%c1_102, %c0_103, %c0_104] : memref<4x8x1xf32, #tpu.memory_space<vmem>>, vector<1x8x1xf32>
      %165 = vector.shape_cast %164 : vector<1x8x1xf32> to vector<8x1xf32>
      %166 = tpu.reciprocal %165 {approx = true} : vector<8x1xf32> -> vector<8x1xf32>
      %167 = arith.mulf %165, %166 : vector<8x1xf32>
      %cst_105 = arith.constant 2.000000e+00 : f32
      %168 = vector.broadcast %cst_105 : f32 to vector<8x1xf32>
      %169 = arith.subf %168, %167 : vector<8x1xf32>
      %170 = arith.mulf %166, %169 : vector<8x1xf32>
      %c1_106 = arith.constant 1 : index
      %c0_107 = arith.constant 0 : index
      %c0_108 = arith.constant 0 : index
      %171 = vector.load %arg8[%c1_106, %c0_107, %c0_108] : memref<4x8x16xf32, #tpu.memory_space<vmem>>, vector<1x8x16xf32>
      %172 = vector.shape_cast %171 : vector<1x8x16xf32> to vector<8x16xf32>
      %173 = vector.broadcast %170 : vector<8x1xf32> to vector<8x16xf32>
      %174 = arith.mulf %172, %173 : vector<8x16xf32>
      %c0_109 = arith.constant 0 : index
      %c0_110 = arith.constant 0 : index
      %c16 = arith.constant 16 : index
      %175 = vector.load %arg5[%c0_109, %c0_110, %c16] : memref<1x8x64xf32, #tpu.memory_space<vmem>>, vector<1x8x16xf32>
      %176 = vector.shape_cast %175 : vector<1x8x16xf32> to vector<8x16xf32>
      %177 = vector.shape_cast %174 : vector<8x16xf32> to vector<1x8x16xf32>
      tpu.vector_store %arg5[%c0_109, %c0_110, %c16], %177 {strides = array<i32>} : memref<1x8x64xf32, #tpu.memory_space<vmem>>, vector<1x8x16xf32>,
      %c2_111 = arith.constant 2 : index
      %c0_112 = arith.constant 0 : index
      %c0_113 = arith.constant 0 : index
      %178 = vector.load %arg7[%c2_111, %c0_112, %c0_113] : memref<4x8x1xf32, #tpu.memory_space<vmem>>, vector<1x8x1xf32>
      %179 = vector.shape_cast %178 : vector<1x8x1xf32> to vector<8x1xf32>
      %180 = tpu.reciprocal %179 {approx = true} : vector<8x1xf32> -> vector<8x1xf32>
      %181 = arith.mulf %179, %180 : vector<8x1xf32>
      %cst_114 = arith.constant 2.000000e+00 : f32
      %182 = vector.broadcast %cst_114 : f32 to vector<8x1xf32>
      %183 = arith.subf %182, %181 : vector<8x1xf32>
      %184 = arith.mulf %180, %183 : vector<8x1xf32>
      %c2_115 = arith.constant 2 : index
      %c0_116 = arith.constant 0 : index
      %c0_117 = arith.constant 0 : index
      %185 = vector.load %arg8[%c2_115, %c0_116, %c0_117] : memref<4x8x16xf32, #tpu.memory_space<vmem>>, vector<1x8x16xf32>
      %186 = vector.shape_cast %185 : vector<1x8x16xf32> to vector<8x16xf32>
      %187 = vector.broadcast %184 : vector<8x1xf32> to vector<8x16xf32>
      %188 = arith.mulf %186, %187 : vector<8x16xf32>
      %c0_118 = arith.constant 0 : index
      %c0_119 = arith.constant 0 : index
      %c32 = arith.constant 32 : index
      %189 = vector.load %arg5[%c0_118, %c0_119, %c32] : memref<1x8x64xf32, #tpu.memory_space<vmem>>, vector<1x8x16xf32>
      %190 = vector.shape_cast %189 : vector<1x8x16xf32> to vector<8x16xf32>
      %191 = vector.shape_cast %188 : vector<8x16xf32> to vector<1x8x16xf32>
      tpu.vector_store %arg5[%c0_118, %c0_119, %c32], %191 {strides = array<i32>} : memref<1x8x64xf32, #tpu.memory_space<vmem>>, vector<1x8x16xf32>,
      %c3_120 = arith.constant 3 : index
      %c0_121 = arith.constant 0 : index
      %c0_122 = arith.constant 0 : index
      %192 = vector.load %arg7[%c3_120, %c0_121, %c0_122] : memref<4x8x1xf32, #tpu.memory_space<vmem>>, vector<1x8x1xf32>
      %193 = vector.shape_cast %192 : vector<1x8x1xf32> to vector<8x1xf32>
      %194 = tpu.reciprocal %193 {approx = true} : vector<8x1xf32> -> vector<8x1xf32>
      %195 = arith.mulf %193, %194 : vector<8x1xf32>
      %cst_123 = arith.constant 2.000000e+00 : f32
      %196 = vector.broadcast %cst_123 : f32 to vector<8x1xf32>
      %197 = arith.subf %196, %195 : vector<8x1xf32>
      %198 = arith.mulf %194, %197 : vector<8x1xf32>
      %c3_124 = arith.constant 3 : index
      %c0_125 = arith.constant 0 : index
      %c0_126 = arith.constant 0 : index
      %199 = vector.load %arg8[%c3_124, %c0_125, %c0_126] : memref<4x8x16xf32, #tpu.memory_space<vmem>>, vector<1x8x16xf32>
      %200 = vector.shape_cast %199 : vector<1x8x16xf32> to vector<8x16xf32>
      %201 = vector.broadcast %198 : vector<8x1xf32> to vector<8x16xf32>
      %202 = arith.mulf %200, %201 : vector<8x16xf32>
      %c0_127 = arith.constant 0 : index
      %c0_128 = arith.constant 0 : index
      %c48 = arith.constant 48 : index
      %203 = vector.load %arg5[%c0_127, %c0_128, %c48] : memref<1x8x64xf32, #tpu.memory_space<vmem>>, vector<1x8x16xf32>
      %204 = vector.shape_cast %203 : vector<1x8x16xf32> to vector<8x16xf32>
      %205 = vector.shape_cast %202 : vector<8x16xf32> to vector<1x8x16xf32>
      tpu.vector_store %arg5[%c0_127, %c0_128, %c48], %205 {strides = array<i32>} : memref<1x8x64xf32, #tpu.memory_space<vmem>>, vector<1x8x16xf32>,
    } else {
    }
    return
  }
  func.func @transform_0(%arg0: i32, %arg1: i32, %arg2: i32) -> (i32, i32, i32) {
    %c0_i32 = arith.constant 0 : i32
    %c0_i32_0 = arith.constant 0 : i32
    return %arg0, %arg1, %c0_i32 : i32, i32, i32
  }
  func.func @transform_1(%arg0: i32, %arg1: i32, %arg2: i32) -> (i32, i32, i32) {
    %c0_i32 = arith.constant 0 : i32
    %c0_i32_0 = arith.constant 0 : i32
    return %arg0, %arg2, %c0_i32 : i32, i32, i32
  }
  func.func @transform_2(%arg0: i32, %arg1: i32, %arg2: i32) -> (i32, i32, i32) {
    %c0_i32 = arith.constant 0 : i32
    %c0_i32_0 = arith.constant 0 : i32
    return %arg0, %arg1, %c0_i32 : i32, i32, i32
  }
}

module attributes {stable_mosaic.version = 11 : i64} {
  func.func @_linear_bias_kernel(%arg0: i32, %arg1: i32, %arg2: i32, %arg3: memref<16x64xf32, #tpu.memory_space<vmem>>, %arg4: memref<64x32xf32, #tpu.memory_space<vmem>>, %arg5: memref<1x32xf32, #tpu.memory_space<vmem>>, %arg6: memref<16x32xf32, #tpu.memory_space<vmem>>, %arg7: memref<16x32xf32, #tpu.memory_space<vmem>>) attributes {dimension_semantics = [#tpu.dimension_semantics<parallel>, #tpu.dimension_semantics<parallel>, #tpu.dimension_semantics<arbitrary>], iteration_bounds = array<i64: 1, 1, 1>, scalar_prefetch = 0 : i64, scratch_operands = 1 : i64, tpu.core_type = #tpu.core_type<tc>, window_params = [{transform_indices = @transform_0, window_bounds = array<i64: 16, 64>}, {transform_indices = @transform_1, window_bounds = array<i64: 64, 32>}, {transform_indices = @transform_2, window_bounds = array<i64: 1, 32>}, {transform_indices = @transform_3, window_bounds = array<i64: 16, 32>}]} {
    %c0_i32 = arith.constant 0 : i32
    %0 = arith.cmpi eq, %arg2, %c0_i32 : i32
    %1 = arith.extui %0 : i1 to i32
    %c0_i32_0 = arith.constant 0 : i32
    %2 = arith.cmpi ne, %1, %c0_i32_0 : i32
    scf.if %2 {
      %cst_10 = arith.constant 0.000000e+00 : f32
      %12 = vector.broadcast %cst_10 : f32 to vector<16x32xf32>
      %c0_11 = arith.constant 0 : index
      %c0_12 = arith.constant 0 : index
      %13 = vector.load %arg7[%c0_11, %c0_12] : memref<16x32xf32, #tpu.memory_space<vmem>>, vector<16x32xf32>
      tpu.vector_store %arg7[%c0_11, %c0_12], %12 {strides = array<i32>} : memref<16x32xf32, #tpu.memory_space<vmem>>, vector<16x32xf32>,
    } else {
    }
    %c0 = arith.constant 0 : index
    %c0_1 = arith.constant 0 : index
    %3 = vector.load %arg7[%c0, %c0_1] : memref<16x32xf32, #tpu.memory_space<vmem>>, vector<16x32xf32>
    %c0_2 = arith.constant 0 : index
    %c0_3 = arith.constant 0 : index
    %4 = vector.load %arg3[%c0_2, %c0_3] : memref<16x64xf32, #tpu.memory_space<vmem>>, vector<16x64xf32>
    %c0_4 = arith.constant 0 : index
    %c0_5 = arith.constant 0 : index
    %5 = vector.load %arg4[%c0_4, %c0_5] : memref<64x32xf32, #tpu.memory_space<vmem>>, vector<64x32xf32>
    %cst = arith.constant dense<0.000000e+00> : vector<16x32xf32>
    %6 = tpu.matmul %4, %5, %cst {dimension_numbers = #tpu.dot_dimension_numbers<[1], [0], [0], [1], [0, 0, 1, 1], [], []>} : vector<16x64xf32>, vector<64x32xf32>, vector<16x32xf32> -> vector<16x32xf32>
    %7 = arith.addf %3, %6 : vector<16x32xf32>
    %c0_6 = arith.constant 0 : index
    %c0_7 = arith.constant 0 : index
    %8 = vector.load %arg7[%c0_6, %c0_7] : memref<16x32xf32, #tpu.memory_space<vmem>>, vector<16x32xf32>
    tpu.vector_store %arg7[%c0_6, %c0_7], %7 {strides = array<i32>} : memref<16x32xf32, #tpu.memory_space<vmem>>, vector<16x32xf32>,
    %c0_i32_8 = arith.constant 0 : i32
    %9 = arith.cmpi eq, %arg2, %c0_i32_8 : i32
    %10 = arith.extui %9 : i1 to i32
    %c0_i32_9 = arith.constant 0 : i32
    %11 = arith.cmpi ne, %10, %c0_i32_9 : i32
    scf.if %11 {
      %c0_10 = arith.constant 0 : index
      %c0_11 = arith.constant 0 : index
      %12 = vector.load %arg7[%c0_10, %c0_11] : memref<16x32xf32, #tpu.memory_space<vmem>>, vector<16x32xf32>
      %c0_12 = arith.constant 0 : index
      %c0_13 = arith.constant 0 : index
      %13 = vector.load %arg5[%c0_12, %c0_13] : memref<1x32xf32, #tpu.memory_space<vmem>>, vector<1x32xf32>
      %14 = vector.broadcast %13 : vector<1x32xf32> to vector<16x32xf32>
      %15 = arith.addf %12, %14 : vector<16x32xf32>
      %c0_14 = arith.constant 0 : index
      %c0_15 = arith.constant 0 : index
      %16 = vector.load %arg6[%c0_14, %c0_15] : memref<16x32xf32, #tpu.memory_space<vmem>>, vector<16x32xf32>
      tpu.vector_store %arg6[%c0_14, %c0_15], %15 {strides = array<i32>} : memref<16x32xf32, #tpu.memory_space<vmem>>, vector<16x32xf32>,
    } else {
    }
    return
  }
  func.func @transform_0(%arg0: i32, %arg1: i32, %arg2: i32) -> (i32, i32) {
    %c0_i32 = arith.constant 0 : i32
    return %arg0, %arg2 : i32, i32
  }
  func.func @transform_1(%arg0: i32, %arg1: i32, %arg2: i32) -> (i32, i32) {
    %c0_i32 = arith.constant 0 : i32
    return %arg2, %arg1 : i32, i32
  }
  func.func @transform_2(%arg0: i32, %arg1: i32, %arg2: i32) -> (i32, i32) {
    %c0_i32 = arith.constant 0 : i32
    %c0_i32_0 = arith.constant 0 : i32
    return %c0_i32, %arg1 : i32, i32
  }
  func.func @transform_3(%arg0: i32, %arg1: i32, %arg2: i32) -> (i32, i32) {
    %c0_i32 = arith.constant 0 : i32
    return %arg0, %arg1 : i32, i32
  }
}

</mosaic_0001>

<llo_original>
// kernel: attention_forward.4
$region0: #{attention_forward.4}
  #allocation0 [shape = 'u32[]', space=smem, size = 0x4, offset = 0x4, fixed_abs, tag = 'smem constant byte address 0x4 - core index']
  #allocation1 [shape = 'u32[72,128]{1,0:T(1,128)}', space=vmem, size = 0x9000, scoped, tag = 'internal scratch']
  #allocation2 [shape = 'f32[16,64]{1,0:T(8,128)}', space=vmem, size = 0x2000, scoped, tag = 'scratch operand']
  %s0 = inlined_call_operand.vmem [shape: f32[16,32], index: 0, kind: input, shape index: {}]
  %s1 = inlined_call_operand.vmem [shape: f32[32,64], index: 1, kind: input, shape index: {}]
  %s2 = inlined_call_operand.vmem [shape: f32[16,64], index: 2, kind: output, shape index: {}]
  %s3 = sld [smem:[#allocation0]]
  $region26: #{attention_forward.4} parent=0
    _
  %s5 = ssub.s32 1, %s3
  %s6 = scalar_select 0, %s5, %s3
  // Predicated region
  $region2: #{attention_forward.4} parent=0 // pred_check
    _
  $region3: #{attention_forward.4} parent=0 // pred_check_branch
    %8 = sbr.rel (0) target = $region5
  $region4: #{attention_forward.4} parent=0 // pred_region
    _
  $region5: #{attention_forward.4} parent=0 // pred_fallthru
    _
  // Predicated region
  $region6: #{attention_forward.4} parent=0 // pred_check
    _
  $region7: #{attention_forward.4} parent=0 // pred_check_branch
    %10 = sbr.rel (0) target = $region9
  $region8: #{attention_forward.4} parent=0 // pred_region
    _
  $region9: #{attention_forward.4} parent=0 // pred_fallthru
    _
  %p11 = scmp.eq.s32.totalorder 0, 0
  // Predicated region
  $region10: #{attention_forward.4} parent=0 // pred_check
    %p12 = pneg %p11
  $region11: #{attention_forward.4} parent=0 // pred_check_branch
    %14 = sbr.rel (%p12) target = $region13
  $region12: #{attention_forward.4} parent=0 // pred_region
    %vm15 = vcmask 523264
    %16 = vst.msk [vmem:[#allocation2] sm:$0xff] %vm15, 0.0
    %17 = vst.msk [vmem:[#allocation2 + $0x8] sm:$0xff] %vm15, 0.0
  $region13: #{attention_forward.4} parent=0 // pred_fallthru
    _
  %v18 = vld [vmem:[#allocation2] sm:$0xff]
  %v19 = vld [vmem:[#allocation2 + $0x8] sm:$0xff]
  %v20 = vld [vmem:[%s0] sm:$0xff]
  %v21 = vld [vmem:[%s0 + $0x8] sm:$0xff]
  %v22 = vld [vmem:[%s1] sm:$0xff]
  %v23 = vld [vmem:[%s1 + $0x8] sm:$0xff]
  %v24 = vld [vmem:[%s1 + $0x10] sm:$0xff]
  %v25 = vld [vmem:[%s1 + $0x18] sm:$0xff]
  %vm26 = vcmask 261120
  %v28 = vsel %vm26, %v20, 0
  %v31 = vsel %vm26, %v21, 0
  %33 = vmatpush.msra.mxu0 0.0
  %34 = vmatpush.msra.mxu0 0.0
  %35 = vmatpush.msra.mxu0 0.0
  %36 = vmatpush.msra.mxu0 0.0
  %37 = vmatpush.msra.mxu0 0.0
  %38 = vmatpush.msra.mxu0 0.0
  %39 = vmatpush.msra.mxu0 0.0
  %40 = vmatpush.msra.mxu0 0.0
  %41 = vmatpush.msra.mxu0 0.0
  %42 = vmatpush.msra.mxu0 0.0
  %43 = vmatpush.msra.mxu0 0.0
  %44 = vmatpush.msra.mxu0 0.0
  %45 = vmatpush.msra.mxu0 %v25
  %46 = vmatpush.msra.mxu0 %v24
  %47 = vmatpush.msra.mxu0 %v23
  %48 = vmatpush.msra.mxu0 %v22
  %49 = vmatmul.f32.gmra.mxu0 %v28
  %v50 = vpop.f32.mrf.mxu0
  %v51 = vadd.f32 0.0, %v50
  %52 = vmatmul.f32.gmra.mxu0 %v31
  %v53 = vpop.f32.mrf.mxu0
  %v54 = vadd.f32 0.0, %v53
  %55 = vdwg.mxu0
  %v56 = vadd.f32 %v18, %v51
  %v57 = vadd.f32 %v19, %v54
  %vm58 = vcmask 523264
  %59 = vst.msk [vmem:[#allocation2] sm:$0xff] %vm58, %v56
  %60 = vst.msk [vmem:[#allocation2 + $0x8] sm:$0xff] %vm58, %v57
  // Predicated region
  $region14: #{attention_forward.4} parent=0 // pred_check
    %p61 = pneg %p11
  $region15: #{attention_forward.4} parent=0 // pred_check_branch
    %63 = sbr.rel (%p61) target = $region17
  $region16: #{attention_forward.4} parent=0 // pred_region
    %v64 = vld [vmem:[#allocation2] sm:$0xff]
    %v65 = vld [vmem:[#allocation2 + $0x8] sm:$0xff]
    %66 = vst.msk [vmem:[%s2] sm:$0xff] %vm58, %v64
    %67 = vst.msk [vmem:[%s2 + $0x8] sm:$0xff] %vm58, %v65
  $region17: #{attention_forward.4} parent=0 // pred_fallthru
    _
  // Predicated region
  $region18: #{attention_forward.4} parent=0 // pred_check
    _
  $region19: #{attention_forward.4} parent=0 // pred_check_branch
    %69 = sbr.rel (0) target = $region21
  $region20: #{attention_forward.4} parent=0 // pred_region
    _
  $region21: #{attention_forward.4} parent=0 // pred_fallthru
    _
  // Predicated region
  $region22: #{attention_forward.4} parent=0 // pred_check
    _
  $region23: #{attention_forward.4} parent=0 // pred_check_branch
    %71 = sbr.rel (0) target = $region25
  $region24: #{attention_forward.4} parent=0 // pred_region
    _
  $region25: #{attention_forward.4} parent=0 // pred_fallthru
    _

// kernel: attention_forward.5
$region0: #{attention_forward.5}
  #allocation0 [shape = 'u32[]', space=smem, size = 0x4, offset = 0x4, fixed_abs, tag = 'smem constant byte address 0x4 - core index']
  #allocation1 [shape = 'u32[72,128]{1,0:T(1,128)}', space=vmem, size = 0x9000, scoped, tag = 'internal scratch']
  #allocation2 [shape = 'f32[16,128]{1,0:T(8,128)}', space=vmem, size = 0x2000, scoped, tag = 'scratch operand']
  %s0 = inlined_call_operand.hbm [shape: f32[16,32], index: 0, kind: input, shape index: {}]
  %s1 = inlined_call_operand.hbm [shape: f32[32,128], index: 1, kind: input, shape index: {}]
  %s2 = inlined_call_operand.vmem [shape: f32[16,128], index: 2, kind: output, shape index: {}]
  %s3 = sld [smem:[#allocation0]]
  $region34: #{attention_forward.5} parent=0
    _
  %s5 = ssub.s32 1, %s3
  %s6 = scalar_select 0, %s5, %s3
  $region1: #{attention_forward.5} parent=0
    #allocation3 [shape = 'u8[8192]{0}', space=vmem, size = 0x2000, scoped, tag = 'input window, operand 0, single buffered']
    #allocation4 [shape = 's32[1]{0}', space=sflag, size = 0x4, scoped, tag = 'scoped memory for attention_forward.5']
    #allocation5 [shape = 'u8[16384]{0}', space=vmem, size = 0x4000, scoped, tag = 'input window, operand 1, single buffered']
    #allocation6 [shape = 's32[1]{0}', space=sflag, size = 0x4, scoped, tag = 'scoped memory for attention_forward.5']
    %7 = vsyncpa [#allocation4], 0
    %8 = vsyncpa [#allocation6], 0
    // Predicated region
    $region2: #{attention_forward.5} parent=1 // pred_check
      _
    $region3: #{attention_forward.5} parent=1 // pred_check_branch
      %10 = sbr.rel (0) target = $region5
    $region4: #{attention_forward.5} parent=1 // pred_region
      %12 = vsyncadd [#allocation4], 0
      %s13 = sshll.u32 %s0, 4
      %s14 = int_to_ptr.hbm [resolvable:$true] %s13
      %s15 = sshll.u32 [#allocation3], 4
      %s16 = int_to_ptr.vmem [resolvable:$true] %s15
      %21 = dma.hbm_to_vmem [thread:$0]  %s14, 256, %s16, [#allocation4], 128, 128, 8
    $region5: #{attention_forward.5} parent=1 // pred_fallthru
      _
    // Predicated region
    $region6: #{attention_forward.5} parent=1 // pred_check
      _
    $region7: #{attention_forward.5} parent=1 // pred_check_branch
      %23 = sbr.rel (0) target = $region9
    $region8: #{attention_forward.5} parent=1 // pred_region
      %25 = vsyncadd [#allocation6], 0
      %s26 = sshll.u32 %s1, 4
      %s27 = int_to_ptr.hbm [resolvable:$true] %s26
      %s28 = sshll.u32 [#allocation5], 4
      %s29 = int_to_ptr.vmem [resolvable:$true] %s28
      %34 = dma.hbm_to_vmem [thread:$0]  %s27, 512, %s29, [#allocation6], 128, 128, 8
    $region9: #{attention_forward.5} parent=1 // pred_fallthru
      _
    // Predicated region
    $region10: #{attention_forward.5} parent=1 // pred_check
      _
    $region11: #{attention_forward.5} parent=1 // pred_check_branch
      %36 = sbr.rel (0) target = $region13
    $region12: #{attention_forward.5} parent=1 // pred_region
      %38 = dma.done [#allocation4], 256
    $region13: #{attention_forward.5} parent=1 // pred_fallthru
      _
    // Predicated region
    $region14: #{attention_forward.5} parent=1 // pred_check
      _
    $region15: #{attention_forward.5} parent=1 // pred_check_branch
      %40 = sbr.rel (0) target = $region17
    $region16: #{attention_forward.5} parent=1 // pred_region
      %42 = dma.done [#allocation6], 512
    $region17: #{attention_forward.5} parent=1 // pred_fallthru
      _
    %p43 = scmp.eq.s32.totalorder 0, 0
    // Predicated region
    $region18: #{attention_forward.5} parent=1 // pred_check
      %p44 = pneg %p43
    $region19: #{attention_forward.5} parent=1 // pred_check_branch
      %46 = sbr.rel (%p44) target = $region21
    $region20: #{attention_forward.5} parent=1 // pred_region
      %47 = vst [vmem:[#allocation2] sm:$0xff] 0.0
      %48 = vst [vmem:[#allocation2 + $0x8] sm:$0xff] 0.0
    $region21: #{attention_forward.5} parent=1 // pred_fallthru
      _
    %v49 = vld [vmem:[#allocation2] sm:$0xff]
    %v50 = vld [vmem:[#allocation2 + $0x8] sm:$0xff]
    %v51 = vld [vmem:[#allocation3] sm:$0xff]
    %v52 = vld [vmem:[#allocation3 + $0x8] sm:$0xff]
    %v53 = vld [vmem:[#allocation5] sm:$0xff]
    %v54 = vld [vmem:[#allocation5 + $0x8] sm:$0xff]
    %v55 = vld [vmem:[#allocation5 + $0x10] sm:$0xff]
    %v56 = vld [vmem:[#allocation5 + $0x18] sm:$0xff]
    %vm57 = vcmask 261120
    %v59 = vsel %vm57, %v51, 0
    %v62 = vsel %vm57, %v52, 0
    %64 = vmatpush.msra.mxu0 0.0
    %65 = vmatpush.msra.mxu0 0.0
    %66 = vmatpush.msra.mxu0 0.0
    %67 = vmatpush.msra.mxu0 0.0
    %68 = vmatpush.msra.mxu0 0.0
    %69 = vmatpush.msra.mxu0 0.0
    %70 = vmatpush.msra.mxu0 0.0
    %71 = vmatpush.msra.mxu0 0.0
    %72 = vmatpush.msra.mxu0 0.0
    %73 = vmatpush.msra.mxu0 0.0
    %74 = vmatpush.msra.mxu0 0.0
    %75 = vmatpush.msra.mxu0 0.0
    %76 = vmatpush.msra.mxu0 %v56
    %77 = vmatpush.msra.mxu0 %v55
    %78 = vmatpush.msra.mxu0 %v54
    %79 = vmatpush.msra.mxu0 %v53
    %80 = vmatmul.f32.gmra.mxu0 %v59
    %v81 = vpop.f32.mrf.mxu0
    %v82 = vadd.f32 0.0, %v81
    %83 = vmatmul.f32.gmra.mxu0 %v62
    %v84 = vpop.f32.mrf.mxu0
    %v85 = vadd.f32 0.0, %v84
    %86 = vdwg.mxu0
    %v87 = vadd.f32 %v49, %v82
    %v88 = vadd.f32 %v50, %v85
    %89 = vst [vmem:[#allocation2] sm:$0xff] %v87
    %90 = vst [vmem:[#allocation2 + $0x8] sm:$0xff] %v88
    // Predicated region
    $region22: #{attention_forward.5} parent=1 // pred_check
      %p91 = pneg %p43
    $region23: #{attention_forward.5} parent=1 // pred_check_branch
      %93 = sbr.rel (%p91) target = $region25
    $region24: #{attention_forward.5} parent=1 // pred_region
      %v94 = vld [vmem:[#allocation2] sm:$0xff]
      %v95 = vld [vmem:[#allocation2 + $0x8] sm:$0xff]
      %96 = vst [vmem:[%s2] sm:$0xff] %v94
      %97 = vst [vmem:[%s2 + $0x8] sm:$0xff] %v95
    $region25: #{attention_forward.5} parent=1 // pred_fallthru
      _
    // Predicated region
    $region26: #{attention_forward.5} parent=1 // pred_check
      _
    $region27: #{attention_forward.5} parent=1 // pred_check_branch
      %99 = sbr.rel (0) target = $region29
    $region28: #{attention_forward.5} parent=1 // pred_region
      _
    $region29: #{attention_forward.5} parent=1 // pred_fallthru
      _
    // Predicated region
    $region30: #{attention_forward.5} parent=1 // pred_check
      _
    $region31: #{attention_forward.5} parent=1 // pred_check_branch
      %101 = sbr.rel (0) target = $region33
    $region32: #{attention_forward.5} parent=1 // pred_region
      _
    $region33: #{attention_forward.5} parent=1 // pred_fallthru
      _
    %102 = vsyncpa [#allocation4], 1
    %103 = vsyncpa [#allocation6], 1

// kernel: attention_forward.6
$region0: #{attention_forward.6}
  #allocation0 [shape = 'u32[]', space=smem, size = 0x4, offset = 0x4, fixed_abs, tag = 'smem constant byte address 0x4 - core index']
  #allocation1 [shape = 'u32[72,128]{1,0:T(1,128)}', space=vmem, size = 0x9000, scoped, tag = 'internal scratch']
  #allocation2 [shape = 'f32[4,8,1]{2,1,0:T(8,128)}', space=vmem, size = 0x4000, scoped, tag = 'scratch operand']
  #allocation3 [shape = 'f32[4,8,1]{2,1,0:T(8,128)}', space=vmem, size = 0x4000, scoped, tag = 'scratch operand']
  #allocation4 [shape = 'f32[4,8,16]{2,1,0:T(8,128)}', space=vmem, size = 0x4000, scoped, tag = 'scratch operand']
  %s0 = inlined_call_operand.vmem [shape: f32[2,8,64], index: 0, kind: input, shape index: {}]
  %s1 = inlined_call_operand.vmem [shape: f32[2,8,128], index: 1, kind: input, shape index: {}]
  %s2 = inlined_call_operand.vmem [shape: f32[2,8,64], index: 2, kind: output, shape index: {}]
  %s3 = sld [smem:[#allocation0]]
  $region49: #{attention_forward.6} parent=0
    _
  %s5 = ssub.s32 1, %s3
  %s6 = scalar_select 0, %s5, %s3
  loop: start=0, step=1, limit=4
  $region2: #{attention_forward.6} parent=0 // loop_pre_header
    _
  $region3: #{attention_forward.6} parent=0 // loop_header
    %s8 = sphi 0, %s12
    %p9 = scmp.ge.s32.totalorder %s8, 4
    %s15 = sphi 0, %s34
    %s16 = sphi 0, %s30
    %s17 = sphi 0, %s26
    %s18 = sphi 0, %s15
    %s19 = sphi 0, %s16
    %s20 = sphi 0, %s17
    %s21 = sphi 0, %s18
    %s22 = sphi 0, %s19
    %s23 = sphi 0, %s20
    %s39 = sphi 0, %s41
    %s42 = sphi 0, %s39
    %s43 = sphi 0, %s42
    %s59 = sphi 0, %s43
    %s67 = sphi 0, %s69
    %s70 = sphi 0, %s67
    %s71 = sphi 0, %s70
    %s87 = sphi 0, %s71
    %s95 = sphi 0, %s97
    %s98 = sphi 0, %s95
    %s99 = sphi 0, %s98
    %s115 = sphi 0, %s99
  $region4: #{attention_forward.6} parent=0 // loop_header_branch
    %11 = sbr.rel (%p9) target = $region8
  $region5: #{attention_forward.6} parent=0 // loop_body
    %s13 = ssub.s32 %s8, 1
    %s14 = ssub.s32 %s8, 2
    %s24 = sadd.s32 1, %s17
    %p25 = scmp.ge.s32.totalorder %s24, 1
    %s26 = scalar_select %p25, 0, %s24
    %s27 = sadd.s32 1, %s16
    %s28 = scalar_select %p25, %s27, %s16
    %p29 = scmp.ge.s32.totalorder %s28, 1
    %s30 = scalar_select %p29, 0, %s28
    %s31 = sadd.s32 1, %s15
    %s32 = scalar_select %p29, %s31, %s15
    %p33 = scmp.ge.s32.totalorder %s32, 2
    %s34 = scalar_select %p33, 0, %s32
    %s35 = ssub.s32 %s15, %s34
    %s36 = ssub.s32 %s16, %s30
    %s37 = sor.u32 %s35, %s36
    %p38 = scmp.eq.s32.totalorder %s37, 0
    %s40 = sadd.s32 %s39, 1
    %s41 = scalar_select %p38, %s39, %s40
    %p44 = pneg %p38
    %p45 = scmp.eq.s32.totalorder %s8, 1
    %p46 = por %p44, %p45
    %p47 = scmp.ne.s32.totalorder %s39, %s42
    %p48 = scmp.eq.s32.totalorder %s8, 0
    %p49 = por %p47, %p48
    %p50 = scmp.ne.s32.totalorder %s39, %s42
    %p51 = scmp.eq.s32.totalorder %s13, 1
    %p52 = por %p50, %p51
    %p53 = scmp.ne.s32.totalorder %s42, %s43
    %p54 = scmp.eq.s32.totalorder %s13, 0
    %p55 = por %p53, %p54
    %p56 = scmp.ne.s32.totalorder %s42, %s43
    %p57 = scmp.eq.s32.totalorder %s14, 1
    %p58 = por %p56, %p57
    %p60 = scmp.ne.s32.totalorder %s43, %s59
    %p61 = scmp.eq.s32.totalorder %s14, 0
    %p62 = por %p60, %p61
    %s63 = ssub.s32 %s15, %s34
    %s64 = ssub.s32 %s17, %s26
    %s65 = sor.u32 %s63, %s64
    %p66 = scmp.eq.s32.totalorder %s65, 0
    %s68 = sadd.s32 %s67, 1
    %s69 = scalar_select %p66, %s67, %s68
    %p72 = pneg %p66
    %p73 = scmp.eq.s32.totalorder %s8, 1
    %p74 = por %p72, %p73
    %p75 = scmp.ne.s32.totalorder %s67, %s70
    %p76 = scmp.eq.s32.totalorder %s8, 0
    %p77 = por %p75, %p76
    %p78 = scmp.ne.s32.totalorder %s67, %s70
    %p79 = scmp.eq.s32.totalorder %s13, 1
    %p80 = por %p78, %p79
    %p81 = scmp.ne.s32.totalorder %s70, %s71
    %p82 = scmp.eq.s32.totalorder %s13, 0
    %p83 = por %p81, %p82
    %p84 = scmp.ne.s32.totalorder %s70, %s71
    %p85 = scmp.eq.s32.totalorder %s14, 1
    %p86 = por %p84, %p85
    %p88 = scmp.ne.s32.totalorder %s71, %s87
    %p89 = scmp.eq.s32.totalorder %s14, 0
    %p90 = por %p88, %p89
    %s91 = ssub.s32 %s15, %s34
    %s92 = ssub.s32 %s16, %s30
    %s93 = sor.u32 %s91, %s92
    %p94 = scmp.eq.s32.totalorder %s93, 0
    %s96 = sadd.s32 %s95, 1
    %s97 = scalar_select %p94, %s95, %s96
    %p100 = pneg %p94
    %p101 = scmp.eq.s32.totalorder %s8, 1
    %p102 = por %p100, %p101
    %p103 = scmp.ne.s32.totalorder %s95, %s98
    %p104 = scmp.eq.s32.totalorder %s8, 0
    %p105 = por %p103, %p104
    %p106 = scmp.ne.s32.totalorder %s95, %s98
    %p107 = scmp.eq.s32.totalorder %s13, 1
    %p108 = por %p106, %p107
    %p109 = scmp.ne.s32.totalorder %s98, %s99
    %p110 = scmp.eq.s32.totalorder %s13, 0
    %p111 = por %p109, %p110
    %p112 = scmp.ne.s32.totalorder %s98, %s99
    %p113 = scmp.eq.s32.totalorder %s14, 1
    %p114 = por %p112, %p113
    %p116 = scmp.ne.s32.totalorder %s99, %s115
    %p117 = scmp.eq.s32.totalorder %s14, 0
    %p118 = por %p116, %p117
    %p119 = scmp.le.s32.totalorder 1, %s8
    %p120 = scmp.lt.s32.totalorder %s8, 3
    %p121 = pnand %p119, %p120
    %p122 = pneg %p121
    // Predicated region
    $region9: #{attention_forward.6} parent=5 // pred_check
      _
    $region10: #{attention_forward.6} parent=5 // pred_check_branch
      %124 = sbr.rel (%p121) target = $region12
    $region11: #{attention_forward.6} parent=5 // pred_region
      %s125 = ssub.s32 %s8, 1
    $region12: #{attention_forward.6} parent=5 // pred_fallthru
      _
    %p126 = scmp.lt.s32.totalorder %s8, 2
    // Predicated region
    $region13: #{attention_forward.6} parent=5 // pred_check
      %p127 = pneg %p126
    $region14: #{attention_forward.6} parent=5 // pred_check_branch
      %129 = sbr.rel (%p127) target = $region16
    $region15: #{attention_forward.6} parent=5 // pred_region
      // Predicated region
      $region17: #{attention_forward.6} parent=15 // pred_check
        %p130 = pneg %p49
      $region18: #{attention_forward.6} parent=15 // pred_check_branch
        %132 = sbr.rel (%p130) target = $region20
      $region19: #{attention_forward.6} parent=15 // pred_region
        %p133 = scmp.lt.s32.totalorder %s15, 1
        %s134 = scalar_select %p133, %s15, 1
        %p135 = scmp.lt.s32.totalorder %s16, 0
        %s136 = scalar_select %p135, %s16, 0
        %s137 = sadd.s32 %s136, %s134
        %s138 = smul.addr %s137, 8
        %s139 = scalar_lea.vmem %s0, %s138
      $region20: #{attention_forward.6} parent=15 // pred_fallthru
        _
      // Predicated region
      $region21: #{attention_forward.6} parent=15 // pred_check
        %p140 = pneg %p77
      $region22: #{attention_forward.6} parent=15 // pred_check_branch
        %142 = sbr.rel (%p140) target = $region24
      $region23: #{attention_forward.6} parent=15 // pred_region
        %p143 = scmp.lt.s32.totalorder %s15, 1
        %s144 = scalar_select %p143, %s15, 1
        %p145 = scmp.lt.s32.totalorder %s17, 0
        %s146 = scalar_select %p145, %s17, 0
        %s147 = sadd.s32 %s146, %s144
        %s148 = smul.addr %s147, 8
        %s149 = scalar_lea.vmem %s1, %s148
      $region24: #{attention_forward.6} parent=15 // pred_fallthru
        _
    $region16: #{attention_forward.6} parent=5 // pred_fallthru
      _
    %p150 = scmp.le.s32.totalorder 1, %s8
    %p151 = scmp.lt.s32.totalorder %s8, 3
    %p152 = pnand %p150, %p151
    %p153 = pneg %p152
    // Predicated region
    $region25: #{attention_forward.6} parent=5 // pred_check
      _
    $region26: #{attention_forward.6} parent=5 // pred_check_branch
      %155 = sbr.rel (%p152) target = $region28
    $region27: #{attention_forward.6} parent=5 // pred_region
      %s156 = ssub.s32 %s8, 1
      %p157 = scmp.lt.s32.totalorder %s18, 1
      %s158 = scalar_select %p157, %s18, 1
      %p159 = scmp.lt.s32.totalorder %s19, 0
      %s160 = scalar_select %p159, %s19, 0
      %s161 = sadd.s32 %s160, %s158
      %s162 = smul.addr %s161, 8
      %s163 = scalar_lea.vmem %s0, %s162
      %p164 = pneg %p55
      %p165 = pneg %p52
      %p166 = scmp.lt.s32.totalorder %s18, 1
      %s167 = scalar_select %p166, %s18, 1
      %p168 = scmp.lt.s32.totalorder %s20, 0
      %s169 = scalar_select %p168, %s20, 0
      %s170 = sadd.s32 %s169, %s167
      %s171 = smul.addr %s170, 8
      %s172 = scalar_lea.vmem %s1, %s171
      %p173 = pneg %p83
      %p174 = pneg %p80
      %p175 = pneg %p111
      %p176 = pneg %p108
      %p177 = scmp.lt.s32.totalorder %s18, 1
      %s178 = scalar_select %p177, %s18, 1
      %p179 = scmp.lt.s32.totalorder %s19, 0
      %s180 = scalar_select %p179, %s19, 0
      %s181 = sadd.s32 %s180, %s178
      %s182 = smul.addr %s181, 8
      %s183 = scalar_lea.vmem %s2, %s182
      %p184 = scmp.lt.s32.totalorder %s18, 1
      %s185 = scalar_select %p184, %s18, 1
      %p186 = scmp.lt.s32.totalorder %s19, 0
      %s187 = scalar_select %p186, %s19, 0
      %s188 = sadd.s32 %s187, %s185
      %s189 = smul.addr %s188, 8
      %s190 = scalar_lea.vmem %s0, %s189
      %p191 = scmp.lt.s32.totalorder %s18, 1
      %s192 = scalar_select %p191, %s18, 1
      %p193 = scmp.lt.s32.totalorder %s20, 0
      %s194 = scalar_select %p193, %s20, 0
      %s195 = sadd.s32 %s194, %s192
      %s196 = smul.addr %s195, 8
      %s197 = scalar_lea.vmem %s1, %s196
      %p198 = scmp.lt.s32.totalorder %s18, 1
      %s199 = scalar_select %p198, %s18, 1
      %p200 = scmp.lt.s32.totalorder %s19, 0
      %s201 = scalar_select %p200, %s19, 0
      %s202 = sadd.s32 %s201, %s199
      %s203 = smul.addr %s202, 8
      %s204 = scalar_lea.vmem %s2, %s203
      %p205 = scmp.eq.s32.totalorder %s20, 0
      // Predicated region
      $region29: #{attention_forward.6} parent=27 // pred_check
        %p206 = pneg %p205
      $region30: #{attention_forward.6} parent=27 // pred_check_branch
        %208 = sbr.rel (%p206) target = $region32
      $region31: #{attention_forward.6} parent=27 // pred_region
        %vm209 = vcmask 7168
        %210 = vst.msk [vmem:[#allocation2] sm:$0xff] %vm209, -inf
        %211 = vst.msk [vmem:[#allocation2 + $0x8] sm:$0xff] %vm209, -inf
        %212 = vst.msk [vmem:[#allocation2 + $0x10] sm:$0xff] %vm209, -inf
        %213 = vst.msk [vmem:[#allocation2 + $0x18] sm:$0xff] %vm209, -inf
        %214 = vst.msk [vmem:[#allocation3] sm:$0xff] %vm209, 0.0
        %215 = vst.msk [vmem:[#allocation3 + $0x8] sm:$0xff] %vm209, 0.0
        %216 = vst.msk [vmem:[#allocation3 + $0x10] sm:$0xff] %vm209, 0.0
        %217 = vst.msk [vmem:[#allocation3 + $0x18] sm:$0xff] %vm209, 0.0
        %vm218 = vcmask 130048
        %219 = vst.msk [vmem:[#allocation4] sm:$0xff] %vm218, 0.0
        %220 = vst.msk [vmem:[#allocation4 + $0x8] sm:$0xff] %vm218, 0.0
        %221 = vst.msk [vmem:[#allocation4 + $0x10] sm:$0xff] %vm218, 0.0
        %222 = vst.msk [vmem:[#allocation4 + $0x18] sm:$0xff] %vm218, 0.0
      $region32: #{attention_forward.6} parent=27 // pred_fallthru
        _
      %v223 = vld [vmem:[%s190] sm:$0xff]
      %v224 = vld [vmem:[%s197] sm:$0xff]
      %vm225 = vcmask 130048
      %v227 = vsel %vm225, %v223, 0
      %v230 = vsel %vm225, %v224, 0
      %232 = vmatpush.xpose.msra.mxu0 0.0
      %233 = vmatpush.xpose.msra.mxu0 0.0
      %234 = vmatpush.xpose.msra.mxu0 0.0
      %235 = vmatpush.xpose.msra.mxu0 0.0
      %236 = vmatpush.xpose.msra.mxu0 0.0
      %237 = vmatpush.xpose.msra.mxu0 0.0
      %238 = vmatpush.xpose.msra.mxu0 0.0
      %239 = vmatpush.xpose.msra.mxu0 0.0
      %240 = vmatpush.xpose.msra.mxu0 0.0
      %241 = vmatpush.xpose.msra.mxu0 0.0
      %242 = vmatpush.xpose.msra.mxu0 0.0
      %243 = vmatpush.xpose.msra.mxu0 0.0
      %244 = vmatpush.xpose.msra.mxu0 0.0
      %245 = vmatpush.xpose.msra.mxu0 0.0
      %246 = vmatpush.xpose.msra.mxu0 0.0
      %247 = vmatpush.xpose.msra.mxu0 %v230
      %248 = vmatmul.f32.gmra.mxu0 %v227
      %v249 = vpop.f32.mrf.mxu0
      %v250 = vadd.f32 0.0, %v249
      %251 = vdwg.mxu0
      %v252 = vld [vmem:[#allocation2] sm:$0xff]
      %vm253 = vcmask 64512
      %v254 = vsel %vm253, %v250, -inf
      %255 = vmax.xlane.f32.xlu0 %v254
      %v256 = vpop.xlane.xlu0 %255
      %v257 = vmax.f32 %v252, %v256
      %v258 = vsub.f32 %v252, %v257
      %v259 = vmul.f32 %v258, 1.442695
      %v260 = vpow.pop %v259
      %262 = vset.pattern.permute.xlu0 0
      %263 = vperm.xlu0 %262, %v257
      %v264 = vpop.permute.xlu0 %263
      %v266 = vsub.f32 %v250, %v264
      %v267 = vmul.f32 %v266, 1.442695
      %v268 = vpow.pop %v267
      %v269 = vld [vmem:[#allocation3] sm:$0xff]
      %v270 = vmul.f32 %v260, %v269
      %v271 = vsel %vm253, %v268, 0.0
      %272 = vadd.xlane.f32.xlu0 %v271
      %v273 = vpop.xlane.xlu0 %272
      %v274 = vadd.f32 %v270, %v273
      %vm275 = vcmask 7168
      %276 = vst.msk [vmem:[#allocation3] sm:$0xff] %vm275, %v274
      %277 = vrot.lane.b32.xlu0 %v224, 64
      %v278 = vpop.permute.xlu0 %277
      %v281 = vsel %vm253, %v268, 0
      %283 = vmatpush.msra.mxu0 0.0
      %284 = vmatpush.msra.mxu0 0.0
      %285 = vmatpush.msra.mxu0 0.0
      %286 = vmatpush.msra.mxu0 0.0
      %287 = vmatpush.msra.mxu0 0.0
      %288 = vmatpush.msra.mxu0 0.0
      %289 = vmatpush.msra.mxu0 0.0
      %290 = vmatpush.msra.mxu0 0.0
      %291 = vmatpush.msra.mxu0 0.0
      %292 = vmatpush.msra.mxu0 0.0
      %293 = vmatpush.msra.mxu0 0.0
      %294 = vmatpush.msra.mxu0 0.0
      %295 = vmatpush.msra.mxu0 0.0
      %296 = vmatpush.msra.mxu0 0.0
      %297 = vmatpush.msra.mxu0 0.0
      %298 = vmatpush.msra.mxu0 %v278
      %299 = vmatmul.f32.gmra.mxu0 %v281
      %v300 = vpop.f32.mrf.mxu0
      %v301 = vadd.f32 0.0, %v300
      %302 = vdwg.mxu0
      %v303 = vld [vmem:[#allocation4] sm:$0xff]
      %305 = vset.pattern.permute.xlu0 0
      %306 = vperm.xlu0 %305, %v260
      %v307 = vpop.permute.xlu0 %306
      %v309 = vmul.f32 %v307, %v303
      %v310 = vadd.f32 %v309, %v301
      %311 = vst.msk [vmem:[#allocation4] sm:$0xff] %vm225, %v310
      %312 = vst.msk [vmem:[#allocation2] sm:$0xff] %vm275, %v257
      %313 = vrot.lane.b32.xlu0 %v223, 112
      %v314 = vpop.permute.xlu0 %313
      %315 = vrot.lane.b32.xlu0 %v224, 112
      %v316 = vpop.permute.xlu0 %315
      %v317 = vsel %vm225, %v314, 0
      %v319 = vsel %vm225, %v316, 0
      %321 = vmatpush.xpose.msra.mxu0 0.0
      %322 = vmatpush.xpose.msra.mxu0 0.0
      %323 = vmatpush.xpose.msra.mxu0 0.0
      %324 = vmatpush.xpose.msra.mxu0 0.0
      %325 = vmatpush.xpose.msra.mxu0 0.0
      %326 = vmatpush.xpose.msra.mxu0 0.0
      %327 = vmatpush.xpose.msra.mxu0 0.0
      %328 = vmatpush.xpose.msra.mxu0 0.0
      %329 = vmatpush.xpose.msra.mxu0 0.0
      %330 = vmatpush.xpose.msra.mxu0 0.0
      %331 = vmatpush.xpose.msra.mxu0 0.0
      %332 = vmatpush.xpose.msra.mxu0 0.0
      %333 = vmatpush.xpose.msra.mxu0 0.0
      %334 = vmatpush.xpose.msra.mxu0 0.0
      %335 = vmatpush.xpose.msra.mxu0 0.0
      %336 = vmatpush.xpose.msra.mxu0 %v319
      %337 = vmatmul.f32.gmra.mxu0 %v317
      %v338 = vpop.f32.mrf.mxu0
      %v339 = vadd.f32 0.0, %v338
      %340 = vdwg.mxu0
      %s341 = scalar_lea.vmem [#allocation2], 8
      %v342 = vld [vmem:[%s341] sm:$0xff]
      %v343 = vsel %vm253, %v339, -inf
      %344 = vmax.xlane.f32.xlu0 %v343
      %v345 = vpop.xlane.xlu0 %344
      %v346 = vmax.f32 %v342, %v345
      %v347 = vsub.f32 %v342, %v346
      %v348 = vmul.f32 %v347, 1.442695
      %v349 = vpow.pop %v348
      %351 = vset.pattern.permute.xlu0 0
      %352 = vperm.xlu0 %351, %v346
      %v353 = vpop.permute.xlu0 %352
      %v355 = vsub.f32 %v339, %v353
      %v356 = vmul.f32 %v355, 1.442695
      %v357 = vpow.pop %v356
      %s358 = scalar_lea.vmem [#allocation3], 8
      %v359 = vld [vmem:[%s358] sm:$0xff]
      %v360 = vmul.f32 %v349, %v359
      %v361 = vsel %vm253, %v357, 0.0
      %362 = vadd.xlane.f32.xlu0 %v361
      %v363 = vpop.xlane.xlu0 %362
      %v364 = vadd.f32 %v360, %v363
      %365 = vst.msk [vmem:[%s358] sm:$0xff] %vm275, %v364
      %366 = vrot.lane.b32.xlu0 %v224, 48
      %v367 = vpop.permute.xlu0 %366
      %v370 = vsel %vm253, %v357, 0
      %372 = vmatpush.msra.mxu0 0.0
      %373 = vmatpush.msra.mxu0 0.0
      %374 = vmatpush.msra.mxu0 0.0
      %375 = vmatpush.msra.mxu0 0.0
      %376 = vmatpush.msra.mxu0 0.0
      %377 = vmatpush.msra.mxu0 0.0
      %378 = vmatpush.msra.mxu0 0.0
      %379 = vmatpush.msra.mxu0 0.0
      %380 = vmatpush.msra.mxu0 0.0
      %381 = vmatpush.msra.mxu0 0.0
      %382 = vmatpush.msra.mxu0 0.0
      %383 = vmatpush.msra.mxu0 0.0
      %384 = vmatpush.msra.mxu0 0.0
      %385 = vmatpush.msra.mxu0 0.0
      %386 = vmatpush.msra.mxu0 0.0
      %387 = vmatpush.msra.mxu0 %v367
      %388 = vmatmul.f32.gmra.mxu0 %v370
      %v389 = vpop.f32.mrf.mxu0
      %v390 = vadd.f32 0.0, %v389
      %391 = vdwg.mxu0
      %s392 = scalar_lea.vmem [#allocation4], 8
      %v393 = vld [vmem:[%s392] sm:$0xff]
      %395 = vset.pattern.permute.xlu0 0
      %396 = vperm.xlu0 %395, %v349
      %v397 = vpop.permute.xlu0 %396
      %v399 = vmul.f32 %v397, %v393
      %v400 = vadd.f32 %v399, %v390
      %401 = vst.msk [vmem:[%s392] sm:$0xff] %vm225, %v400
      %402 = vst.msk [vmem:[%s341] sm:$0xff] %vm275, %v346
      %403 = vrot.lane.b32.xlu0 %v223, 96
      %v404 = vpop.permute.xlu0 %403
      %405 = vrot.lane.b32.xlu0 %v224, 96
      %v406 = vpop.permute.xlu0 %405
      %v407 = vsel %vm225, %v404, 0
      %v409 = vsel %vm225, %v406, 0
      %411 = vmatpush.xpose.msra.mxu0 0.0
      %412 = vmatpush.xpose.msra.mxu0 0.0
      %413 = vmatpush.xpose.msra.mxu0 0.0
      %414 = vmatpush.xpose.msra.mxu0 0.0
      %415 = vmatpush.xpose.msra.mxu0 0.0
      %416 = vmatpush.xpose.msra.mxu0 0.0
      %417 = vmatpush.xpose.msra.mxu0 0.0
      %418 = vmatpush.xpose.msra.mxu0 0.0
      %419 = vmatpush.xpose.msra.mxu0 0.0
      %420 = vmatpush.xpose.msra.mxu0 0.0
      %421 = vmatpush.xpose.msra.mxu0 0.0
      %422 = vmatpush.xpose.msra.mxu0 0.0
      %423 = vmatpush.xpose.msra.mxu0 0.0
      %424 = vmatpush.xpose.msra.mxu0 0.0
      %425 = vmatpush.xpose.msra.mxu0 0.0
      %426 = vmatpush.xpose.msra.mxu0 %v409
      %427 = vmatmul.f32.gmra.mxu0 %v407
      %v428 = vpop.f32.mrf.mxu0
      %v429 = vadd.f32 0.0, %v428
      %430 = vdwg.mxu0
      %s431 = scalar_lea.vmem [#allocation2], 16
      %v432 = vld [vmem:[%s431] sm:$0xff]
      %v433 = vsel %vm253, %v429, -inf
      %434 = vmax.xlane.f32.xlu0 %v433
      %v435 = vpop.xlane.xlu0 %434
      %v436 = vmax.f32 %v432, %v435
      %v437 = vsub.f32 %v432, %v436
      %v438 = vmul.f32 %v437, 1.442695
      %v439 = vpow.pop %v438
      %441 = vset.pattern.permute.xlu0 0
      %442 = vperm.xlu0 %441, %v436
      %v443 = vpop.permute.xlu0 %442
      %v445 = vsub.f32 %v429, %v443
      %v446 = vmul.f32 %v445, 1.442695
      %v447 = vpow.pop %v446
      %s448 = scalar_lea.vmem [#allocation3], 16
      %v449 = vld [vmem:[%s448] sm:$0xff]
      %v450 = vmul.f32 %v439, %v449
      %v451 = vsel %vm253, %v447, 0.0
      %452 = vadd.xlane.f32.xlu0 %v451
      %v453 = vpop.xlane.xlu0 %452
      %v454 = vadd.f32 %v450, %v453
      %455 = vst.msk [vmem:[%s448] sm:$0xff] %vm275, %v454
      %456 = vrot.lane.b32.xlu0 %v224, 32
      %v457 = vpop.permute.xlu0 %456
      %v460 = vsel %vm253, %v447, 0
      %462 = vmatpush.msra.mxu0 0.0
      %463 = vmatpush.msra.mxu0 0.0
      %464 = vmatpush.msra.mxu0 0.0
      %465 = vmatpush.msra.mxu0 0.0
      %466 = vmatpush.msra.mxu0 0.0
      %467 = vmatpush.msra.mxu0 0.0
      %468 = vmatpush.msra.mxu0 0.0
      %469 = vmatpush.msra.mxu0 0.0
      %470 = vmatpush.msra.mxu0 0.0
      %471 = vmatpush.msra.mxu0 0.0
      %472 = vmatpush.msra.mxu0 0.0
      %473 = vmatpush.msra.mxu0 0.0
      %474 = vmatpush.msra.mxu0 0.0
      %475 = vmatpush.msra.mxu0 0.0
      %476 = vmatpush.msra.mxu0 0.0
      %477 = vmatpush.msra.mxu0 %v457
      %478 = vmatmul.f32.gmra.mxu0 %v460
      %v479 = vpop.f32.mrf.mxu0
      %v480 = vadd.f32 0.0, %v479
      %481 = vdwg.mxu0
      %s482 = scalar_lea.vmem [#allocation4], 16
      %v483 = vld [vmem:[%s482] sm:$0xff]
      %485 = vset.pattern.permute.xlu0 0
      %486 = vperm.xlu0 %485, %v439
      %v487 = vpop.permute.xlu0 %486
      %v489 = vmul.f32 %v487, %v483
      %v490 = vadd.f32 %v489, %v480
      %491 = vst.msk [vmem:[%s482] sm:$0xff] %vm225, %v490
      %492 = vst.msk [vmem:[%s431] sm:$0xff] %vm275, %v436
      %493 = vrot.lane.b32.xlu0 %v223, 80
      %v494 = vpop.permute.xlu0 %493
      %495 = vrot.lane.b32.xlu0 %v224, 80
      %v496 = vpop.permute.xlu0 %495
      %v497 = vsel %vm225, %v494, 0
      %v499 = vsel %vm225, %v496, 0
      %501 = vmatpush.xpose.msra.mxu0 0.0
      %502 = vmatpush.xpose.msra.mxu0 0.0
      %503 = vmatpush.xpose.msra.mxu0 0.0
      %504 = vmatpush.xpose.msra.mxu0 0.0
      %505 = vmatpush.xpose.msra.mxu0 0.0
      %506 = vmatpush.xpose.msra.mxu0 0.0
      %507 = vmatpush.xpose.msra.mxu0 0.0
      %508 = vmatpush.xpose.msra.mxu0 0.0
      %509 = vmatpush.xpose.msra.mxu0 0.0
      %510 = vmatpush.xpose.msra.mxu0 0.0
      %511 = vmatpush.xpose.msra.mxu0 0.0
      %512 = vmatpush.xpose.msra.mxu0 0.0
      %513 = vmatpush.xpose.msra.mxu0 0.0
      %514 = vmatpush.xpose.msra.mxu0 0.0
      %515 = vmatpush.xpose.msra.mxu0 0.0
      %516 = vmatpush.xpose.msra.mxu0 %v499
      %517 = vmatmul.f32.gmra.mxu0 %v497
      %v518 = vpop.f32.mrf.mxu0
      %v519 = vadd.f32 0.0, %v518
      %520 = vdwg.mxu0
      %s521 = scalar_lea.vmem [#allocation2], 24
      %v522 = vld [vmem:[%s521] sm:$0xff]
      %v523 = vsel %vm253, %v519, -inf
      %524 = vmax.xlane.f32.xlu0 %v523
      %v525 = vpop.xlane.xlu0 %524
      %v526 = vmax.f32 %v522, %v525
      %v527 = vsub.f32 %v522, %v526
      %v528 = vmul.f32 %v527, 1.442695
      %v529 = vpow.pop %v528
      %531 = vset.pattern.permute.xlu0 0
      %532 = vperm.xlu0 %531, %v526
      %v533 = vpop.permute.xlu0 %532
      %v535 = vsub.f32 %v519, %v533
      %v536 = vmul.f32 %v535, 1.442695
      %v537 = vpow.pop %v536
      %s538 = scalar_lea.vmem [#allocation3], 24
      %v539 = vld [vmem:[%s538] sm:$0xff]
      %v540 = vmul.f32 %v529, %v539
      %v541 = vsel %vm253, %v537, 0.0
      %542 = vadd.xlane.f32.xlu0 %v541
      %v543 = vpop.xlane.xlu0 %542
      %v544 = vadd.f32 %v540, %v543
      %545 = vst.msk [vmem:[%s538] sm:$0xff] %vm275, %v544
      %546 = vrot.lane.b32.xlu0 %v224, 16
      %v547 = vpop.permute.xlu0 %546
      %v550 = vsel %vm253, %v537, 0
      %552 = vmatpush.msra.mxu0 0.0
      %553 = vmatpush.msra.mxu0 0.0
      %554 = vmatpush.msra.mxu0 0.0
      %555 = vmatpush.msra.mxu0 0.0
      %556 = vmatpush.msra.mxu0 0.0
      %557 = vmatpush.msra.mxu0 0.0
      %558 = vmatpush.msra.mxu0 0.0
      %559 = vmatpush.msra.mxu0 0.0
      %560 = vmatpush.msra.mxu0 0.0
      %561 = vmatpush.msra.mxu0 0.0
      %562 = vmatpush.msra.mxu0 0.0
      %563 = vmatpush.msra.mxu0 0.0
      %564 = vmatpush.msra.mxu0 0.0
      %565 = vmatpush.msra.mxu0 0.0
      %566 = vmatpush.msra.mxu0 0.0
      %567 = vmatpush.msra.mxu0 %v547
      %568 = vmatmul.f32.gmra.mxu0 %v550
      %v569 = vpop.f32.mrf.mxu0
      %v570 = vadd.f32 0.0, %v569
      %571 = vdwg.mxu0
      %s572 = scalar_lea.vmem [#allocation4], 24
      %v573 = vld [vmem:[%s572] sm:$0xff]
      %575 = vset.pattern.permute.xlu0 0
      %576 = vperm.xlu0 %575, %v529
      %v577 = vpop.permute.xlu0 %576
      %v579 = vmul.f32 %v577, %v573
      %v580 = vadd.f32 %v579, %v570
      %581 = vst.msk [vmem:[%s572] sm:$0xff] %vm225, %v580
      %582 = vst.msk [vmem:[%s521] sm:$0xff] %vm275, %v526
      // Predicated region
      $region33: #{attention_forward.6} parent=27 // pred_check
        %p583 = pneg %p205
      $region34: #{attention_forward.6} parent=27 // pred_check_branch
        %585 = sbr.rel (%p583) target = $region36
      $region35: #{attention_forward.6} parent=27 // pred_region
        %v586 = vld [vmem:[#allocation3] sm:$0xff]
        %v587 = vrcp.pop %v586
        %v588 = vmul.f32 %v586, %v587
        %v589 = vsub.f32 2.0, %v588
        %v590 = vmul.f32 %v587, %v589
        %v591 = vld [vmem:[#allocation4] sm:$0xff]
        %593 = vset.pattern.permute.xlu0 0
        %594 = vperm.xlu0 %593, %v590
        %v595 = vpop.permute.xlu0 %594
        %v597 = vmul.f32 %v591, %v595
        %598 = vst.msk [vmem:[%s204] sm:$0xff] %vm225, %v597
        %v599 = vld [vmem:[%s358] sm:$0xff]
        %v600 = vrcp.pop %v599
        %v601 = vmul.f32 %v599, %v600
        %v602 = vsub.f32 2.0, %v601
        %v603 = vmul.f32 %v600, %v602
        %v604 = vld [vmem:[%s392] sm:$0xff]
        %606 = vset.pattern.permute.xlu0 0
        %607 = vperm.xlu0 %606, %v603
        %v608 = vpop.permute.xlu0 %607
        %v610 = vmul.f32 %v604, %v608
        %612 = vrot.lane.b32.xlu0 %v610, 16
        %v613 = vpop.permute.xlu0 %612
        %vm615 = vcmask 261248
        %616 = vst.msk [vmem:[%s204] sm:$0xff] %vm615, %v613
        %v617 = vld [vmem:[%s448] sm:$0xff]
        %v618 = vrcp.pop %v617
        %v619 = vmul.f32 %v617, %v618
        %v620 = vsub.f32 2.0, %v619
        %v621 = vmul.f32 %v618, %v620
        %v622 = vld [vmem:[%s482] sm:$0xff]
        %624 = vset.pattern.permute.xlu0 0
        %625 = vperm.xlu0 %624, %v621
        %v626 = vpop.permute.xlu0 %625
        %v628 = vmul.f32 %v622, %v626
        %630 = vrot.lane.b32.xlu0 %v628, 32
        %v631 = vpop.permute.xlu0 %630
        %vm633 = vcmask 392448
        %634 = vst.msk [vmem:[%s204] sm:$0xff] %vm633, %v631
        %v635 = vld [vmem:[%s538] sm:$0xff]
        %v636 = vrcp.pop %v635
        %v637 = vmul.f32 %v635, %v636
        %v638 = vsub.f32 2.0, %v637
        %v639 = vmul.f32 %v636, %v638
        %v640 = vld [vmem:[%s572] sm:$0xff]
        %642 = vset.pattern.permute.xlu0 0
        %643 = vperm.xlu0 %642, %v639
        %v644 = vpop.permute.xlu0 %643
        %v646 = vmul.f32 %v640, %v644
        %648 = vrot.lane.b32.xlu0 %v646, 48
        %v649 = vpop.permute.xlu0 %648
        %vm651 = vcmask 523648
        %652 = vst.msk [vmem:[%s204] sm:$0xff] %vm651, %v649
      $region36: #{attention_forward.6} parent=27 // pred_fallthru
        _
      %p653 = scmp.lt.s32.totalorder %s18, 1
      %s654 = scalar_select %p653, %s18, 1
      %p655 = scmp.lt.s32.totalorder %s19, 0
      %s656 = scalar_select %p655, %s19, 0
      %s657 = sadd.s32 %s656, %s654
      %s658 = smul.addr %s657, 8
      %s659 = scalar_lea.vmem %s2, %s658
      // Predicated region
      $region37: #{attention_forward.6} parent=27 // pred_check
        %p660 = pneg %p108
      $region38: #{attention_forward.6} parent=27 // pred_check_branch
        %662 = sbr.rel (%p660) target = $region40
      $region39: #{attention_forward.6} parent=27 // pred_region
        _
      $region40: #{attention_forward.6} parent=27 // pred_fallthru
        _
    $region28: #{attention_forward.6} parent=5 // pred_fallthru
      _
    %p663 = scmp.le.s32.totalorder 2, %s8
    // Predicated region
    $region41: #{attention_forward.6} parent=5 // pred_check
      %p664 = pneg %p663
    $region42: #{attention_forward.6} parent=5 // pred_check_branch
      %666 = sbr.rel (%p664) target = $region44
    $region43: #{attention_forward.6} parent=5 // pred_region
      %s667 = ssub.s32 %s8, 2
      // Predicated region
      $region45: #{attention_forward.6} parent=43 // pred_check
        %p668 = pneg %p114
      $region46: #{attention_forward.6} parent=43 // pred_check_branch
        %670 = sbr.rel (%p668) target = $region48
      $region47: #{attention_forward.6} parent=43 // pred_region
        %p671 = scmp.lt.s32.totalorder %s21, 1
        %s672 = scalar_select %p671, %s21, 1
        %p673 = scmp.lt.s32.totalorder %s22, 0
        %s674 = scalar_select %p673, %s22, 0
        %s675 = sadd.s32 %s674, %s672
        %s676 = smul.addr %s675, 8
        %s677 = scalar_lea.vmem %s2, %s676
      $region48: #{attention_forward.6} parent=43 // pred_fallthru
        _
    $region44: #{attention_forward.6} parent=5 // pred_fallthru
      _
  $region6: #{attention_forward.6} parent=0 // loop_footer
    %s12 = sadd.s32 1, %s8
  $region7: #{attention_forward.6} parent=0 // loop_footer_branch
    %7 = sbr.rel target = $region3
  $region8: #{attention_forward.6} parent=0 // loop_exit
    _

// kernel: attention_forward.7
$region0: #{attention_forward.7}
  #allocation0 [shape = 'u32[]', space=smem, size = 0x4, offset = 0x4, fixed_abs, tag = 'smem constant byte address 0x4 - core index']
  #allocation1 [shape = 'u32[72,128]{1,0:T(1,128)}', space=vmem, size = 0x9000, scoped, tag = 'internal scratch']
  #allocation2 [shape = 'f32[16,32]{1,0:T(8,128)}', space=vmem, size = 0x2000, scoped, tag = 'scratch operand']
  %s0 = inlined_call_operand.vmem [shape: f32[16,64], index: 0, kind: input, shape index: {}]
  %s1 = inlined_call_operand.vmem [shape: f32[64,32], index: 1, kind: input, shape index: {}]
  %s2 = inlined_call_operand.vmem [shape: f32[1,32], index: 2, kind: input, shape index: {}]
  %s3 = inlined_call_operand.hbm [shape: f32[16,32], index: 3, kind: output, shape index: {}]
  %s4 = sld [smem:[#allocation0]]
  $region30: #{attention_forward.7} parent=0
    _
  %s6 = ssub.s32 1, %s4
  %s7 = scalar_select 0, %s6, %s4
  $region1: #{attention_forward.7} parent=0
    #allocation3 [shape = 'u8[8192]{0}', space=vmem, size = 0x2000, scoped, tag = 'output window, operand 0, single buffered']
    #allocation4 [shape = 's32[1]{0}', space=sflag, size = 0x4, scoped, tag = 'scoped memory for attention_forward.7']
    %8 = vsyncpa [#allocation4], 0
    // Predicated region
    $region2: #{attention_forward.7} parent=1 // pred_check
      _
    $region3: #{attention_forward.7} parent=1 // pred_check_branch
      %10 = sbr.rel (0) target = $region5
    $region4: #{attention_forward.7} parent=1 // pred_region
      _
    $region5: #{attention_forward.7} parent=1 // pred_fallthru
      _
    // Predicated region
    $region6: #{attention_forward.7} parent=1 // pred_check
      _
    $region7: #{attention_forward.7} parent=1 // pred_check_branch
      %12 = sbr.rel (0) target = $region9
    $region8: #{attention_forward.7} parent=1 // pred_region
      _
    $region9: #{attention_forward.7} parent=1 // pred_fallthru
      _
    // Predicated region
    $region10: #{attention_forward.7} parent=1 // pred_check
      _
    $region11: #{attention_forward.7} parent=1 // pred_check_branch
      %14 = sbr.rel (0) target = $region13
    $region12: #{attention_forward.7} parent=1 // pred_region
      _
    $region13: #{attention_forward.7} parent=1 // pred_fallthru
      _
    %p15 = scmp.eq.s32.totalorder 0, 0
    // Predicated region
    $region14: #{attention_forward.7} parent=1 // pred_check
      %p16 = pneg %p15
    $region15: #{attention_forward.7} parent=1 // pred_check_branch
      %18 = sbr.rel (%p16) target = $region17
    $region16: #{attention_forward.7} parent=1 // pred_region
      %vm19 = vcmask 261120
      %20 = vst.msk [vmem:[#allocation2] sm:$0xff] %vm19, 0.0
      %21 = vst.msk [vmem:[#allocation2 + $0x8] sm:$0xff] %vm19, 0.0
    $region17: #{attention_forward.7} parent=1 // pred_fallthru
      _
    %v22 = vld [vmem:[#allocation2] sm:$0xff]
    %v23 = vld [vmem:[#allocation2 + $0x8] sm:$0xff]
    %v24 = vld [vmem:[%s0] sm:$0xff]
    %v25 = vld [vmem:[%s0 + $0x8] sm:$0xff]
    %v26 = vld [vmem:[%s1] sm:$0xff]
    %v27 = vld [vmem:[%s1 + $0x8] sm:$0xff]
    %v28 = vld [vmem:[%s1 + $0x10] sm:$0xff]
    %v29 = vld [vmem:[%s1 + $0x18] sm:$0xff]
    %v30 = vld [vmem:[%s1 + $0x20] sm:$0xff]
    %v31 = vld [vmem:[%s1 + $0x28] sm:$0xff]
    %v32 = vld [vmem:[%s1 + $0x30] sm:$0xff]
    %v33 = vld [vmem:[%s1 + $0x38] sm:$0xff]
    %vm34 = vcmask 523264
    %v36 = vsel %vm34, %v24, 0
    %v39 = vsel %vm34, %v25, 0
    %41 = vmatpush.msra.mxu0 0.0
    %42 = vmatpush.msra.mxu0 0.0
    %43 = vmatpush.msra.mxu0 0.0
    %44 = vmatpush.msra.mxu0 0.0
    %45 = vmatpush.msra.mxu0 0.0
    %46 = vmatpush.msra.mxu0 0.0
    %47 = vmatpush.msra.mxu0 0.0
    %48 = vmatpush.msra.mxu0 0.0
    %49 = vmatpush.msra.mxu0 %v33
    %50 = vmatpush.msra.mxu0 %v32
    %51 = vmatpush.msra.mxu0 %v31
    %52 = vmatpush.msra.mxu0 %v30
    %53 = vmatpush.msra.mxu0 %v29
    %54 = vmatpush.msra.mxu0 %v28
    %55 = vmatpush.msra.mxu0 %v27
    %56 = vmatpush.msra.mxu0 %v26
    %57 = vmatmul.f32.gmra.mxu0 %v36
    %v58 = vpop.f32.mrf.mxu0
    %v59 = vadd.f32 0.0, %v58
    %60 = vmatmul.f32.gmra.mxu0 %v39
    %v61 = vpop.f32.mrf.mxu0
    %v62 = vadd.f32 0.0, %v61
    %63 = vdwg.mxu0
    %v64 = vadd.f32 %v22, %v59
    %v65 = vadd.f32 %v23, %v62
    %vm66 = vcmask 261120
    %67 = vst.msk [vmem:[#allocation2] sm:$0xff] %vm66, %v64
    %68 = vst.msk [vmem:[#allocation2 + $0x8] sm:$0xff] %vm66, %v65
    // Predicated region
    $region18: #{attention_forward.7} parent=1 // pred_check
      %p69 = pneg %p15
    $region19: #{attention_forward.7} parent=1 // pred_check_branch
      %71 = sbr.rel (%p69) target = $region21
    $region20: #{attention_forward.7} parent=1 // pred_region
      %v72 = vld [vmem:[#allocation2] sm:$0xff]
      %v73 = vld [vmem:[#allocation2 + $0x8] sm:$0xff]
      %v74 = vld [vmem:[%s2] sm:$0x1]
      %v76 = vperm.slane %v74, 0
      %v78 = vadd.f32 %v72, %v76
      %v79 = vadd.f32 %v73, %v76
      %80 = vst.msk [vmem:[#allocation3] sm:$0xff] %vm66, %v78
      %81 = vst.msk [vmem:[#allocation3 + $0x8] sm:$0xff] %vm66, %v79
    $region21: #{attention_forward.7} parent=1 // pred_fallthru
      _
    // Predicated region
    $region22: #{attention_forward.7} parent=1 // pred_check
      _
    $region23: #{attention_forward.7} parent=1 // pred_check_branch
      %83 = sbr.rel (0) target = $region25
    $region24: #{attention_forward.7} parent=1 // pred_region
      %85 = vsyncadd [#allocation4], 0
      %s86 = sshll.u32 [#allocation3], 4
      %s87 = int_to_ptr.vmem [resolvable:$true] %s86
      %s88 = sshll.u32 %s3, 4
      %s89 = int_to_ptr.hbm [resolvable:$true] %s88
      %94 = dma.vmem_to_hbm [thread:$0]  %s87, 256, %s89, [#allocation4], 128, 128, 8
    $region25: #{attention_forward.7} parent=1 // pred_fallthru
      _
    // Predicated region
    $region26: #{attention_forward.7} parent=1 // pred_check
      _
    $region27: #{attention_forward.7} parent=1 // pred_check_branch
      %96 = sbr.rel (0) target = $region29
    $region28: #{attention_forward.7} parent=1 // pred_region
      %98 = dma.done [#allocation4], 256
    $region29: #{attention_forward.7} parent=1 // pred_fallthru
      _
    %99 = vsyncpa [#allocation4], 1

</llo_original>
